<compile_context>
chip_gen: v5e
topology: v5e:2x2
jax: 0.10.0
libtpu: 0.0.40
codegen_flags: <defaults>
</compile_context>

<pallas_src>
import functools

import jax
import jax.numpy as jnp
import numpy as np
from jax.experimental import pallas as pl
from jax.experimental.pallas import tpu as pltpu


# ----------------------------- Pallas kernel --------------------------------
def encoder_lstm_kernel(x_ref, w_ref, b_ref, y_ref, hn_ref, cn_ref, buf_ref):
    """Fused multi-layer LSTM over the full sequence.

    x_ref  : (T, Bp, Din)      layer-0 input (embeddings), zero-padded to Din
    w_ref  : (L, Din+H, 4H)    per-layer fused [W_ih; W_hh] (gate order i,f,g,o)
    b_ref  : (L, 1, 4H)        per-layer fused bias (b_ih + b_hh)
    y_ref  : (T, Bp, H)        per-timestep hidden states of the LAST layer
    hn_ref : (L, Bp, H)        final hidden state per layer
    cn_ref : (L, Bp, H)        final cell   state per layer
    buf_ref: (T, Bp, Din)      VMEM scratch holding inter-layer activations
    """
    T, Bp, Din = x_ref.shape
    L = w_ref.shape[0]
    H = hn_ref.shape[-1]

    for layer in range(L):                      # static unroll over layers
        w_l = w_ref[layer]                      # (Din+H, 4H) -- loaded once
        b_l = b_ref[layer]                      # (1, 4H)
        src = x_ref if layer == 0 else buf_ref  # layer>0 reads previous layer

        def step(t, carry):
            h_prev, c_prev = carry              # (Bp, H) each, live in vregs
            x_t = src[t]                        # (Bp, Din)
            xh = jnp.concatenate([x_t, h_prev], axis=-1)        # (Bp, Din+H)
            gates = jnp.dot(xh, w_l, preferred_element_type=jnp.float32) + b_l

            # Full-width nonlinearities (EUP), then static lane slices.
            sig = jax.nn.sigmoid(gates)         # (Bp, 4H)
            tnh = jnp.tanh(gates)               # (Bp, 4H)
            i_g = sig[:, 0 * H:1 * H]
            f_g = sig[:, 1 * H:2 * H]
            g_g = tnh[:, 2 * H:3 * H]
            o_g = sig[:, 3 * H:4 * H]

            c_new = f_g * c_prev + i_g * g_g
            h_new = o_g * jnp.tanh(c_new)

            # Store this layer's output (input of the next layer / final y).
            if Din == H:
                buf_ref[t] = h_new
            else:
                buf_ref[t] = jnp.concatenate(
                    [h_new, jnp.zeros((Bp, Din - H), jnp.float32)], axis=-1)
            return h_new, c_new

        h0 = jnp.zeros((Bp, H), jnp.float32)
        c0 = jnp.zeros((Bp, H), jnp.float32)
        h_f, c_f = jax.lax.fori_loop(0, T, step, (h0, c0), unroll=True)

        hn_ref[layer] = h_f
        cn_ref[layer] = c_f

    # Last layer's per-timestep hidden states -> kernel output (time-major).
    y_ref[...] = buf_ref[:, :, :H] if Din > H else buf_ref[...]


# ----------------------------- Parameters ------------------------------------
def init_encoder_params(key, vocab_size, embedding_dim, n_layers, hidden_size):
    """Synthetic params matching nn.Embedding + nn.LSTM, pre-packed for the kernel.

    Weights are stored fused & stacked: w[l] = [W_ih_l (padded to Din rows);
    W_hh_l], shape (Din+H, 4H) with Din = max(E, H). Gate order i, f, g, o.
    """
    E, H, L = embedding_dim, hidden_size, n_layers
    Din = max(E, H)

    params = {}
    key, k_emb = jax.random.split(key)
    params["embed"] = jax.random.normal(k_emb, (vocab_size, E), jnp.float32)

    bound = float(hidden_size) ** -0.5
    ws, bs = [], []
    in_dim = E
    for _ in range(L):
        key, k1, k2, k3, k4 = jax.random.split(key, 5)
        w_ih = jax.random.uniform(k1, (in_dim, 4 * H), jnp.float32, -bound, bound)
        w_hh = jax.random.uniform(k2, (H, 4 * H), jnp.float32, -bound, bound)
        b_ih = jax.random.uniform(k3, (4 * H,), jnp.float32, -bound, bound)
        b_hh = jax.random.uniform(k4, (4 * H,), jnp.float32, -bound, bound)

        w_x = jnp.zeros((Din, 4 * H), jnp.float32).at[:in_dim, :].set(w_ih)
        ws.append(jnp.concatenate([w_x, w_hh], axis=0))        # (Din+H, 4H)
        bs.append((b_ih + b_hh).reshape(1, 4 * H))
        in_dim = H

    params["w"] = jnp.stack(ws)                                # (L, Din+H, 4H)
    params["b"] = jnp.stack(bs)                                # (L, 1, 4H)
    return params


# ----------------------------- Forward (wrapper) ------------------------------
@functools.partial(jax.jit, static_argnames=("hidden_size",))
def encoder_forward(params, x_ids, hidden, hidden_size):
    """Mirrors Encoder_model.forward: x = embed(x); x, h = lstm(x); return x, h."""
    del hidden  # unused, exactly like the reference forward()

    B, T = x_ids.shape
    H = hidden_size
    E = params["embed"].shape[1]
    L = params["w"].shape[0]
    Din = params["w"].shape[1] - H          # = max(E, H)
    Bp = ((B + 7) // 8) * 8                 # pad batch to f32 sublane multiple

    # Embedding gather, directly time-major (T, B, E) -> no big transpose.
    # TODO(synk): could fuse the gather into the kernel via scalar-prefetched ids.
    emb_tm = jnp.take(params["embed"], x_ids.T, axis=0)        # (T, B, E)
    x_tm = jnp.zeros((T, Bp, Din), jnp.float32).at[:, :B, :E].set(emb_tm)

    y_tm, h_n, c_n = pl.pallas_call(
        encoder_lstm_kernel,
        out_shape=(
            jax.ShapeDtypeStruct((T, Bp, H), jnp.float32),     # last-layer h_t
            jax.ShapeDtypeStruct((L, Bp, H), jnp.float32),     # final h per layer
            jax.ShapeDtypeStruct((L, Bp, H), jnp.float32),     # final c per layer
        ),
        in_specs=[pl.BlockSpec(memory_space=pltpu.MemorySpace.VMEM)] * 3,
        out_specs=(pl.BlockSpec(memory_space=pltpu.MemorySpace.VMEM),) * 3,
        scratch_shapes=[pltpu.VMEM((T, Bp, Din), jnp.float32)],
    )(x_tm, params["w"], params["b"])

    out = jnp.transpose(y_tm[:, :B, :], (1, 0, 2))             # (B, T, H)
    return out, (h_n[:, :B, :], c_n[:, :B, :])


# ----------------------------- Pure-JAX reference -----------------------------
def reference_forward(params, x_ids, hidden_size):
    H = hidden_size
    L = params["w"].shape[0]
    Din = params["w"].shape[1] - H
    B = x_ids.shape[0]

    x = jnp.take(params["embed"], x_ids, axis=0)               # (B, T, E)
    h_fs, c_fs = [], []
    for l in range(L):
        w = params["w"][l]
        b = params["b"][l]

        def step(carry, x_t, w=w, b=b):
            h, c = carry
            x_pad = jnp.zeros((B, Din), jnp.float32).at[:, :x_t.shape[1]].set(x_t)
            gates = jnp.concatenate([x_pad, h], axis=-1) @ w + b
            i = jax.nn.sigmoid(gates[:, :H])
            f = jax.nn.sigmoid(gates[:, H:2 * H])
            g = jnp.tanh(gates[:, 2 * H:3 * H])
            o = jax.nn.sigmoid(gates[:, 3 * H:])
            c = f * c + i * g
            h = o * jnp.tanh(c)
            return (h, c), h

        init = (jnp.zeros((B, H), jnp.float32), jnp.zeros((B, H), jnp.float32))
        (h_f, c_f), ys = jax.lax.scan(step, init, jnp.swapaxes(x, 0, 1))
        x = jnp.swapaxes(ys, 0, 1)
        h_fs.append(h_f)
        c_fs.append(c_f)
    return x, (jnp.stack(h_fs), jnp.stack(c_fs))


# ----------------------------- Main -------------------------------------------
if __name__ == "__main__":
    vocab_size = 50
    embedding_dim = 32
    hidden_size = 32
    n_layers = 2
    batch = 2
    seq_len = 8

    key = jax.random.PRNGKey(0)
    key, k_ids = jax.random.split(key)

    params = init_encoder_params(key, vocab_size, embedding_dim, n_layers,
                                 hidden_size)
    x_ids = jax.random.randint(k_ids, (batch, seq_len), 0, vocab_size,
                               dtype=jnp.int32)

    # initHidden equivalent (ignored by forward, as in the PyTorch code)
    h0 = jnp.zeros((n_layers, batch, hidden_size), jnp.float32)
    c0 = jnp.zeros((n_layers, batch, hidden_size), jnp.float32)

    out, (h_n, c_n) = encoder_forward(params, x_ids, (h0, c0), hidden_size)
    jax.block_until_ready((out, h_n, c_n))

    assert out.shape == (batch, seq_len, hidden_size)
    assert h_n.shape == (n_layers, batch, hidden_size)
    assert c_n.shape == (n_layers, batch, hidden_size)

    # Numerical check against a pure-JAX reference LSTM.
    out_r, (h_r, c_r) = reference_forward(params, x_ids, hidden_size)
    np.testing.assert_allclose(np.asarray(out), np.asarray(out_r),
                               atol=2e-3, rtol=2e-3)
    np.testing.assert_allclose(np.asarray(h_n), np.asarray(h_r),
                               atol=2e-3, rtol=2e-3)
    np.testing.assert_allclose(np.asarray(c_n), np.asarray(c_r),
                               atol=2e-3, rtol=2e-3)

    print("KERNEL_OK")
</pallas_src>

<mosaic_0001>
module attributes {stable_mosaic.version = 11 : i64} {
  func.func @encoder_lstm_kernel(%arg0: memref<8x8x32xf32, #tpu.memory_space<vmem>>, %arg1: memref<2x64x128xf32, #tpu.memory_space<vmem>>, %arg2: memref<2x1x128xf32, #tpu.memory_space<vmem>>, %arg3: memref<8x8x32xf32, #tpu.memory_space<vmem>>, %arg4: memref<2x8x32xf32, #tpu.memory_space<vmem>>, %arg5: memref<2x8x32xf32, #tpu.memory_space<vmem>>, %arg6: memref<8x8x32xf32, #tpu.memory_space<vmem>>) attributes {dimension_semantics = [], scalar_prefetch = 0 : i64, scratch_operands = 1 : i64, tpu.core_type = #tpu.core_type<tc>} {
    %c0 = arith.constant 0 : index
    %c0_0 = arith.constant 0 : index
    %c0_1 = arith.constant 0 : index
    %0 = vector.load %arg1[%c0, %c0_0, %c0_1] : memref<2x64x128xf32, #tpu.memory_space<vmem>>, vector<1x64x128xf32>
    %1 = vector.shape_cast %0 : vector<1x64x128xf32> to vector<64x128xf32>
    %c0_2 = arith.constant 0 : index
    %c0_3 = arith.constant 0 : index
    %c0_4 = arith.constant 0 : index
    %2 = vector.load %arg2[%c0_2, %c0_3, %c0_4] : memref<2x1x128xf32, #tpu.memory_space<vmem>>, vector<1x1x128xf32>
    %3 = vector.shape_cast %2 : vector<1x1x128xf32> to vector<1x128xf32>
    %cst = arith.constant 0.000000e+00 : f32
    %4 = vector.broadcast %cst : f32 to vector<8x32xf32>
    %cst_5 = arith.constant 0.000000e+00 : f32
    %5 = vector.broadcast %cst_5 : f32 to vector<8x32xf32>
    %c0_i32 = arith.constant 0 : i32
    %6 = arith.index_cast %c0_i32 : i32 to index
    %c0_6 = arith.constant 0 : index
    %c0_7 = arith.constant 0 : index
    %7 = vector.load %arg0[%6, %c0_6, %c0_7] : memref<8x8x32xf32, #tpu.memory_space<vmem>>, vector<1x8x32xf32>
    %8 = vector.shape_cast %7 : vector<1x8x32xf32> to vector<8x32xf32>
    %9 = tpu.concatenate %8, %4 in 1 : vector<8x32xf32>, vector<8x32xf32> -> vector<8x64xf32>
    %cst_8 = arith.constant dense<0.000000e+00> : vector<8x128xf32>
    %10 = tpu.matmul %9, %1, %cst_8 {dimension_numbers = #tpu.dot_dimension_numbers<[1], [0], [0], [1], [0, 0, 1, 1], [], []>} : vector<8x64xf32>, vector<64x128xf32>, vector<8x128xf32> -> vector<8x128xf32>
    %11 = vector.broadcast %3 : vector<1x128xf32> to vector<8x128xf32>
    %12 = arith.addf %10, %11 : vector<8x128xf32>
    %13 = arith.negf %12 : vector<8x128xf32>
    %14 = math.exp %13 : vector<8x128xf32>
    %cst_9 = arith.constant 1.000000e+00 : f32
    %15 = vector.broadcast %cst_9 : f32 to vector<8x128xf32>
    %16 = arith.addf %15, %14 : vector<8x128xf32>
    %17 = arith.divf %15, %16 : vector<8x128xf32>
    %18 = math.tanh %12 : vector<8x128xf32>
    %19 = vector.extract_strided_slice %17 {offsets = [0, 0], sizes = [8, 32], strides = [1, 1]} : vector<8x128xf32> to vector<8x32xf32>
    %20 = vector.extract_strided_slice %17 {offsets = [0, 32], sizes = [8, 32], strides = [1, 1]} : vector<8x128xf32> to vector<8x32xf32>
    %21 = vector.extract_strided_slice %18 {offsets = [0, 64], sizes = [8, 32], strides = [1, 1]} : vector<8x128xf32> to vector<8x32xf32>
    %22 = vector.extract_strided_slice %17 {offsets = [0, 96], sizes = [8, 32], strides = [1, 1]} : vector<8x128xf32> to vector<8x32xf32>
    %23 = arith.mulf %20, %5 : vector<8x32xf32>
    %24 = arith.mulf %19, %21 : vector<8x32xf32>
    %25 = arith.addf %23, %24 : vector<8x32xf32>
    %26 = math.tanh %25 : vector<8x32xf32>
    %27 = arith.mulf %22, %26 : vector<8x32xf32>
    %28 = arith.index_cast %c0_i32 : i32 to index
    %c0_10 = arith.constant 0 : index
    %c0_11 = arith.constant 0 : index
    %29 = vector.load %arg6[%28, %c0_10, %c0_11] : memref<8x8x32xf32, #tpu.memory_space<vmem>>, vector<1x8x32xf32>
    %30 = vector.shape_cast %29 : vector<1x8x32xf32> to vector<8x32xf32>
    %31 = vector.shape_cast %27 : vector<8x32xf32> to vector<1x8x32xf32>
    tpu.vector_store %arg6[%28, %c0_10, %c0_11], %31 {strides = array<i32>} : memref<8x8x32xf32, #tpu.memory_space<vmem>>, vector<1x8x32xf32>,
    %c1_i32 = arith.constant 1 : i32
    %32 = arith.index_cast %c1_i32 : i32 to index
    %c0_12 = arith.constant 0 : index
    %c0_13 = arith.constant 0 : index
    %33 = vector.load %arg0[%32, %c0_12, %c0_13] : memref<8x8x32xf32, #tpu.memory_space<vmem>>, vector<1x8x32xf32>
    %34 = vector.shape_cast %33 : vector<1x8x32xf32> to vector<8x32xf32>
    %35 = tpu.concatenate %34, %27 in 1 : vector<8x32xf32>, vector<8x32xf32> -> vector<8x64xf32>
    %cst_14 = arith.constant dense<0.000000e+00> : vector<8x128xf32>
    %36 = tpu.matmul %35, %1, %cst_14 {dimension_numbers = #tpu.dot_dimension_numbers<[1], [0], [0], [1], [0, 0, 1, 1], [], []>} : vector<8x64xf32>, vector<64x128xf32>, vector<8x128xf32> -> vector<8x128xf32>
    %37 = vector.broadcast %3 : vector<1x128xf32> to vector<8x128xf32>
    %38 = arith.addf %36, %37 : vector<8x128xf32>
    %39 = arith.negf %38 : vector<8x128xf32>
    %40 = math.exp %39 : vector<8x128xf32>
    %cst_15 = arith.constant 1.000000e+00 : f32
    %41 = vector.broadcast %cst_15 : f32 to vector<8x128xf32>
    %42 = arith.addf %41, %40 : vector<8x128xf32>
    %43 = arith.divf %41, %42 : vector<8x128xf32>
    %44 = math.tanh %38 : vector<8x128xf32>
    %45 = vector.extract_strided_slice %43 {offsets = [0, 0], sizes = [8, 32], strides = [1, 1]} : vector<8x128xf32> to vector<8x32xf32>
    %46 = vector.extract_strided_slice %43 {offsets = [0, 32], sizes = [8, 32], strides = [1, 1]} : vector<8x128xf32> to vector<8x32xf32>
    %47 = vector.extract_strided_slice %44 {offsets = [0, 64], sizes = [8, 32], strides = [1, 1]} : vector<8x128xf32> to vector<8x32xf32>
    %48 = vector.extract_strided_slice %43 {offsets = [0, 96], sizes = [8, 32], strides = [1, 1]} : vector<8x128xf32> to vector<8x32xf32>
    %49 = arith.mulf %46, %25 : vector<8x32xf32>
    %50 = arith.mulf %45, %47 : vector<8x32xf32>
    %51 = arith.addf %49, %50 : vector<8x32xf32>
    %52 = math.tanh %51 : vector<8x32xf32>
    %53 = arith.mulf %48, %52 : vector<8x32xf32>
    %54 = arith.index_cast %c1_i32 : i32 to index
    %c0_16 = arith.constant 0 : index
    %c0_17 = arith.constant 0 : index
    %55 = vector.load %arg6[%54, %c0_16, %c0_17] : memref<8x8x32xf32, #tpu.memory_space<vmem>>, vector<1x8x32xf32>
    %56 = vector.shape_cast %55 : vector<1x8x32xf32> to vector<8x32xf32>
    %57 = vector.shape_cast %53 : vector<8x32xf32> to vector<1x8x32xf32>
    tpu.vector_store %arg6[%54, %c0_16, %c0_17], %57 {strides = array<i32>} : memref<8x8x32xf32, #tpu.memory_space<vmem>>, vector<1x8x32xf32>,
    %c2_i32 = arith.constant 2 : i32
    %58 = arith.index_cast %c2_i32 : i32 to index
    %c0_18 = arith.constant 0 : index
    %c0_19 = arith.constant 0 : index
    %59 = vector.load %arg0[%58, %c0_18, %c0_19] : memref<8x8x32xf32, #tpu.memory_space<vmem>>, vector<1x8x32xf32>
    %60 = vector.shape_cast %59 : vector<1x8x32xf32> to vector<8x32xf32>
    %61 = tpu.concatenate %60, %53 in 1 : vector<8x32xf32>, vector<8x32xf32> -> vector<8x64xf32>
    %cst_20 = arith.constant dense<0.000000e+00> : vector<8x128xf32>
    %62 = tpu.matmul %61, %1, %cst_20 {dimension_numbers = #tpu.dot_dimension_numbers<[1], [0], [0], [1], [0, 0, 1, 1], [], []>} : vector<8x64xf32>, vector<64x128xf32>, vector<8x128xf32> -> vector<8x128xf32>
    %63 = vector.broadcast %3 : vector<1x128xf32> to vector<8x128xf32>
    %64 = arith.addf %62, %63 : vector<8x128xf32>
    %65 = arith.negf %64 : vector<8x128xf32>
    %66 = math.exp %65 : vector<8x128xf32>
    %cst_21 = arith.constant 1.000000e+00 : f32
    %67 = vector.broadcast %cst_21 : f32 to vector<8x128xf32>
    %68 = arith.addf %67, %66 : vector<8x128xf32>
    %69 = arith.divf %67, %68 : vector<8x128xf32>
    %70 = math.tanh %64 : vector<8x128xf32>
    %71 = vector.extract_strided_slice %69 {offsets = [0, 0], sizes = [8, 32], strides = [1, 1]} : vector<8x128xf32> to vector<8x32xf32>
    %72 = vector.extract_strided_slice %69 {offsets = [0, 32], sizes = [8, 32], strides = [1, 1]} : vector<8x128xf32> to vector<8x32xf32>
    %73 = vector.extract_strided_slice %70 {offsets = [0, 64], sizes = [8, 32], strides = [1, 1]} : vector<8x128xf32> to vector<8x32xf32>
    %74 = vector.extract_strided_slice %69 {offsets = [0, 96], sizes = [8, 32], strides = [1, 1]} : vector<8x128xf32> to vector<8x32xf32>
    %75 = arith.mulf %72, %51 : vector<8x32xf32>
    %76 = arith.mulf %71, %73 : vector<8x32xf32>
    %77 = arith.addf %75, %76 : vector<8x32xf32>
    %78 = math.tanh %77 : vector<8x32xf32>
    %79 = arith.mulf %74, %78 : vector<8x32xf32>
    %80 = arith.index_cast %c2_i32 : i32 to index
    %c0_22 = arith.constant 0 : index
    %c0_23 = arith.constant 0 : index
    %81 = vector.load %arg6[%80, %c0_22, %c0_23] : memref<8x8x32xf32, #tpu.memory_space<vmem>>, vector<1x8x32xf32>
    %82 = vector.shape_cast %81 : vector<1x8x32xf32> to vector<8x32xf32>
    %83 = vector.shape_cast %79 : vector<8x32xf32> to vector<1x8x32xf32>
    tpu.vector_store %arg6[%80, %c0_22, %c0_23], %83 {strides = array<i32>} : memref<8x8x32xf32, #tpu.memory_space<vmem>>, vector<1x8x32xf32>,
    %c3_i32 = arith.constant 3 : i32
    %84 = arith.index_cast %c3_i32 : i32 to index
    %c0_24 = arith.constant 0 : index
    %c0_25 = arith.constant 0 : index
    %85 = vector.load %arg0[%84, %c0_24, %c0_25] : memref<8x8x32xf32, #tpu.memory_space<vmem>>, vector<1x8x32xf32>
    %86 = vector.shape_cast %85 : vector<1x8x32xf32> to vector<8x32xf32>
    %87 = tpu.concatenate %86, %79 in 1 : vector<8x32xf32>, vector<8x32xf32> -> vector<8x64xf32>
    %cst_26 = arith.constant dense<0.000000e+00> : vector<8x128xf32>
    %88 = tpu.matmul %87, %1, %cst_26 {dimension_numbers = #tpu.dot_dimension_numbers<[1], [0], [0], [1], [0, 0, 1, 1], [], []>} : vector<8x64xf32>, vector<64x128xf32>, vector<8x128xf32> -> vector<8x128xf32>
    %89 = vector.broadcast %3 : vector<1x128xf32> to vector<8x128xf32>
    %90 = arith.addf %88, %89 : vector<8x128xf32>
    %91 = arith.negf %90 : vector<8x128xf32>
    %92 = math.exp %91 : vector<8x128xf32>
    %cst_27 = arith.constant 1.000000e+00 : f32
    %93 = vector.broadcast %cst_27 : f32 to vector<8x128xf32>
    %94 = arith.addf %93, %92 : vector<8x128xf32>
    %95 = arith.divf %93, %94 : vector<8x128xf32>
    %96 = math.tanh %90 : vector<8x128xf32>
    %97 = vector.extract_strided_slice %95 {offsets = [0, 0], sizes = [8, 32], strides = [1, 1]} : vector<8x128xf32> to vector<8x32xf32>
    %98 = vector.extract_strided_slice %95 {offsets = [0, 32], sizes = [8, 32], strides = [1, 1]} : vector<8x128xf32> to vector<8x32xf32>
    %99 = vector.extract_strided_slice %96 {offsets = [0, 64], sizes = [8, 32], strides = [1, 1]} : vector<8x128xf32> to vector<8x32xf32>
    %100 = vector.extract_strided_slice %95 {offsets = [0, 96], sizes = [8, 32], strides = [1, 1]} : vector<8x128xf32> to vector<8x32xf32>
    %101 = arith.mulf %98, %77 : vector<8x32xf32>
    %102 = arith.mulf %97, %99 : vector<8x32xf32>
    %103 = arith.addf %101, %102 : vector<8x32xf32>
    %104 = math.tanh %103 : vector<8x32xf32>
    %105 = arith.mulf %100, %104 : vector<8x32xf32>
    %106 = arith.index_cast %c3_i32 : i32 to index
    %c0_28 = arith.constant 0 : index
    %c0_29 = arith.constant 0 : index
    %107 = vector.load %arg6[%106, %c0_28, %c0_29] : memref<8x8x32xf32, #tpu.memory_space<vmem>>, vector<1x8x32xf32>
    %108 = vector.shape_cast %107 : vector<1x8x32xf32> to vector<8x32xf32>
    %109 = vector.shape_cast %105 : vector<8x32xf32> to vector<1x8x32xf32>
    tpu.vector_store %arg6[%106, %c0_28, %c0_29], %109 {strides = array<i32>} : memref<8x8x32xf32, #tpu.memory_space<vmem>>, vector<1x8x32xf32>,
    %c4_i32 = arith.constant 4 : i32
    %110 = arith.index_cast %c4_i32 : i32 to index
    %c0_30 = arith.constant 0 : index
    %c0_31 = arith.constant 0 : index
    %111 = vector.load %arg0[%110, %c0_30, %c0_31] : memref<8x8x32xf32, #tpu.memory_space<vmem>>, vector<1x8x32xf32>
    %112 = vector.shape_cast %111 : vector<1x8x32xf32> to vector<8x32xf32>
    %113 = tpu.concatenate %112, %105 in 1 : vector<8x32xf32>, vector<8x32xf32> -> vector<8x64xf32>
    %cst_32 = arith.constant dense<0.000000e+00> : vector<8x128xf32>
    %114 = tpu.matmul %113, %1, %cst_32 {dimension_numbers = #tpu.dot_dimension_numbers<[1], [0], [0], [1], [0, 0, 1, 1], [], []>} : vector<8x64xf32>, vector<64x128xf32>, vector<8x128xf32> -> vector<8x128xf32>
    %115 = vector.broadcast %3 : vector<1x128xf32> to vector<8x128xf32>
    %116 = arith.addf %114, %115 : vector<8x128xf32>
    %117 = arith.negf %116 : vector<8x128xf32>
    %118 = math.exp %117 : vector<8x128xf32>
    %cst_33 = arith.constant 1.000000e+00 : f32
    %119 = vector.broadcast %cst_33 : f32 to vector<8x128xf32>
    %120 = arith.addf %119, %118 : vector<8x128xf32>
    %121 = arith.divf %119, %120 : vector<8x128xf32>
    %122 = math.tanh %116 : vector<8x128xf32>
    %123 = vector.extract_strided_slice %121 {offsets = [0, 0], sizes = [8, 32], strides = [1, 1]} : vector<8x128xf32> to vector<8x32xf32>
    %124 = vector.extract_strided_slice %121 {offsets = [0, 32], sizes = [8, 32], strides = [1, 1]} : vector<8x128xf32> to vector<8x32xf32>
    %125 = vector.extract_strided_slice %122 {offsets = [0, 64], sizes = [8, 32], strides = [1, 1]} : vector<8x128xf32> to vector<8x32xf32>
    %126 = vector.extract_strided_slice %121 {offsets = [0, 96], sizes = [8, 32], strides = [1, 1]} : vector<8x128xf32> to vector<8x32xf32>
    %127 = arith.mulf %124, %103 : vector<8x32xf32>
    %128 = arith.mulf %123, %125 : vector<8x32xf32>
    %129 = arith.addf %127, %128 : vector<8x32xf32>
    %130 = math.tanh %129 : vector<8x32xf32>
    %131 = arith.mulf %126, %130 : vector<8x32xf32>
    %132 = arith.index_cast %c4_i32 : i32 to index
    %c0_34 = arith.constant 0 : index
    %c0_35 = arith.constant 0 : index
    %133 = vector.load %arg6[%132, %c0_34, %c0_35] : memref<8x8x32xf32, #tpu.memory_space<vmem>>, vector<1x8x32xf32>
    %134 = vector.shape_cast %133 : vector<1x8x32xf32> to vector<8x32xf32>
    %135 = vector.shape_cast %131 : vector<8x32xf32> to vector<1x8x32xf32>
    tpu.vector_store %arg6[%132, %c0_34, %c0_35], %135 {strides = array<i32>} : memref<8x8x32xf32, #tpu.memory_space<vmem>>, vector<1x8x32xf32>,
    %c5_i32 = arith.constant 5 : i32
    %136 = arith.index_cast %c5_i32 : i32 to index
    %c0_36 = arith.constant 0 : index
    %c0_37 = arith.constant 0 : index
    %137 = vector.load %arg0[%136, %c0_36, %c0_37] : memref<8x8x32xf32, #tpu.memory_space<vmem>>, vector<1x8x32xf32>
    %138 = vector.shape_cast %137 : vector<1x8x32xf32> to vector<8x32xf32>
    %139 = tpu.concatenate %138, %131 in 1 : vector<8x32xf32>, vector<8x32xf32> -> vector<8x64xf32>
    %cst_38 = arith.constant dense<0.000000e+00> : vector<8x128xf32>
    %140 = tpu.matmul %139, %1, %cst_38 {dimension_numbers = #tpu.dot_dimension_numbers<[1], [0], [0], [1], [0, 0, 1, 1], [], []>} : vector<8x64xf32>, vector<64x128xf32>, vector<8x128xf32> -> vector<8x128xf32>
    %141 = vector.broadcast %3 : vector<1x128xf32> to vector<8x128xf32>
    %142 = arith.addf %140, %141 : vector<8x128xf32>
    %143 = arith.negf %142 : vector<8x128xf32>
    %144 = math.exp %143 : vector<8x128xf32>
    %cst_39 = arith.constant 1.000000e+00 : f32
    %145 = vector.broadcast %cst_39 : f32 to vector<8x128xf32>
    %146 = arith.addf %145, %144 : vector<8x128xf32>
    %147 = arith.divf %145, %146 : vector<8x128xf32>
    %148 = math.tanh %142 : vector<8x128xf32>
    %149 = vector.extract_strided_slice %147 {offsets = [0, 0], sizes = [8, 32], strides = [1, 1]} : vector<8x128xf32> to vector<8x32xf32>
    %150 = vector.extract_strided_slice %147 {offsets = [0, 32], sizes = [8, 32], strides = [1, 1]} : vector<8x128xf32> to vector<8x32xf32>
    %151 = vector.extract_strided_slice %148 {offsets = [0, 64], sizes = [8, 32], strides = [1, 1]} : vector<8x128xf32> to vector<8x32xf32>
    %152 = vector.extract_strided_slice %147 {offsets = [0, 96], sizes = [8, 32], strides = [1, 1]} : vector<8x128xf32> to vector<8x32xf32>
    %153 = arith.mulf %150, %129 : vector<8x32xf32>
    %154 = arith.mulf %149, %151 : vector<8x32xf32>
    %155 = arith.addf %153, %154 : vector<8x32xf32>
    %156 = math.tanh %155 : vector<8x32xf32>
    %157 = arith.mulf %152, %156 : vector<8x32xf32>
    %158 = arith.index_cast %c5_i32 : i32 to index
    %c0_40 = arith.constant 0 : index
    %c0_41 = arith.constant 0 : index
    %159 = vector.load %arg6[%158, %c0_40, %c0_41] : memref<8x8x32xf32, #tpu.memory_space<vmem>>, vector<1x8x32xf32>
    %160 = vector.shape_cast %159 : vector<1x8x32xf32> to vector<8x32xf32>
    %161 = vector.shape_cast %157 : vector<8x32xf32> to vector<1x8x32xf32>
    tpu.vector_store %arg6[%158, %c0_40, %c0_41], %161 {strides = array<i32>} : memref<8x8x32xf32, #tpu.memory_space<vmem>>, vector<1x8x32xf32>,
    %c6_i32 = arith.constant 6 : i32
    %162 = arith.index_cast %c6_i32 : i32 to index
    %c0_42 = arith.constant 0 : index
    %c0_43 = arith.constant 0 : index
    %163 = vector.load %arg0[%162, %c0_42, %c0_43] : memref<8x8x32xf32, #tpu.memory_space<vmem>>, vector<1x8x32xf32>
    %164 = vector.shape_cast %163 : vector<1x8x32xf32> to vector<8x32xf32>
    %165 = tpu.concatenate %164, %157 in 1 : vector<8x32xf32>, vector<8x32xf32> -> vector<8x64xf32>
    %cst_44 = arith.constant dense<0.000000e+00> : vector<8x128xf32>
    %166 = tpu.matmul %165, %1, %cst_44 {dimension_numbers = #tpu.dot_dimension_numbers<[1], [0], [0], [1], [0, 0, 1, 1], [], []>} : vector<8x64xf32>, vector<64x128xf32>, vector<8x128xf32> -> vector<8x128xf32>
    %167 = vector.broadcast %3 : vector<1x128xf32> to vector<8x128xf32>
    %168 = arith.addf %166, %167 : vector<8x128xf32>
    %169 = arith.negf %168 : vector<8x128xf32>
    %170 = math.exp %169 : vector<8x128xf32>
    %cst_45 = arith.constant 1.000000e+00 : f32
    %171 = vector.broadcast %cst_45 : f32 to vector<8x128xf32>
    %172 = arith.addf %171, %170 : vector<8x128xf32>
    %173 = arith.divf %171, %172 : vector<8x128xf32>
    %174 = math.tanh %168 : vector<8x128xf32>
    %175 = vector.extract_strided_slice %173 {offsets = [0, 0], sizes = [8, 32], strides = [1, 1]} : vector<8x128xf32> to vector<8x32xf32>
    %176 = vector.extract_strided_slice %173 {offsets = [0, 32], sizes = [8, 32], strides = [1, 1]} : vector<8x128xf32> to vector<8x32xf32>
    %177 = vector.extract_strided_slice %174 {offsets = [0, 64], sizes = [8, 32], strides = [1, 1]} : vector<8x128xf32> to vector<8x32xf32>
    %178 = vector.extract_strided_slice %173 {offsets = [0, 96], sizes = [8, 32], strides = [1, 1]} : vector<8x128xf32> to vector<8x32xf32>
    %179 = arith.mulf %176, %155 : vector<8x32xf32>
    %180 = arith.mulf %175, %177 : vector<8x32xf32>
    %181 = arith.addf %179, %180 : vector<8x32xf32>
    %182 = math.tanh %181 : vector<8x32xf32>
    %183 = arith.mulf %178, %182 : vector<8x32xf32>
    %184 = arith.index_cast %c6_i32 : i32 to index
    %c0_46 = arith.constant 0 : index
    %c0_47 = arith.constant 0 : index
    %185 = vector.load %arg6[%184, %c0_46, %c0_47] : memref<8x8x32xf32, #tpu.memory_space<vmem>>, vector<1x8x32xf32>
    %186 = vector.shape_cast %185 : vector<1x8x32xf32> to vector<8x32xf32>
    %187 = vector.shape_cast %183 : vector<8x32xf32> to vector<1x8x32xf32>
    tpu.vector_store %arg6[%184, %c0_46, %c0_47], %187 {strides = array<i32>} : memref<8x8x32xf32, #tpu.memory_space<vmem>>, vector<1x8x32xf32>,
    %c7_i32 = arith.constant 7 : i32
    %188 = arith.index_cast %c7_i32 : i32 to index
    %c0_48 = arith.constant 0 : index
    %c0_49 = arith.constant 0 : index
    %189 = vector.load %arg0[%188, %c0_48, %c0_49] : memref<8x8x32xf32, #tpu.memory_space<vmem>>, vector<1x8x32xf32>
    %190 = vector.shape_cast %189 : vector<1x8x32xf32> to vector<8x32xf32>
    %191 = tpu.concatenate %190, %183 in 1 : vector<8x32xf32>, vector<8x32xf32> -> vector<8x64xf32>
    %cst_50 = arith.constant dense<0.000000e+00> : vector<8x128xf32>
    %192 = tpu.matmul %191, %1, %cst_50 {dimension_numbers = #tpu.dot_dimension_numbers<[1], [0], [0], [1], [0, 0, 1, 1], [], []>} : vector<8x64xf32>, vector<64x128xf32>, vector<8x128xf32> -> vector<8x128xf32>
    %193 = vector.broadcast %3 : vector<1x128xf32> to vector<8x128xf32>
    %194 = arith.addf %192, %193 : vector<8x128xf32>
    %195 = arith.negf %194 : vector<8x128xf32>
    %196 = math.exp %195 : vector<8x128xf32>
    %cst_51 = arith.constant 1.000000e+00 : f32
    %197 = vector.broadcast %cst_51 : f32 to vector<8x128xf32>
    %198 = arith.addf %197, %196 : vector<8x128xf32>
    %199 = arith.divf %197, %198 : vector<8x128xf32>
    %200 = math.tanh %194 : vector<8x128xf32>
    %201 = vector.extract_strided_slice %199 {offsets = [0, 0], sizes = [8, 32], strides = [1, 1]} : vector<8x128xf32> to vector<8x32xf32>
    %202 = vector.extract_strided_slice %199 {offsets = [0, 32], sizes = [8, 32], strides = [1, 1]} : vector<8x128xf32> to vector<8x32xf32>
    %203 = vector.extract_strided_slice %200 {offsets = [0, 64], sizes = [8, 32], strides = [1, 1]} : vector<8x128xf32> to vector<8x32xf32>
    %204 = vector.extract_strided_slice %199 {offsets = [0, 96], sizes = [8, 32], strides = [1, 1]} : vector<8x128xf32> to vector<8x32xf32>
    %205 = arith.mulf %202, %181 : vector<8x32xf32>
    %206 = arith.mulf %201, %203 : vector<8x32xf32>
    %207 = arith.addf %205, %206 : vector<8x32xf32>
    %208 = math.tanh %207 : vector<8x32xf32>
    %209 = arith.mulf %204, %208 : vector<8x32xf32>
    %210 = arith.index_cast %c7_i32 : i32 to index
    %c0_52 = arith.constant 0 : index
    %c0_53 = arith.constant 0 : index
    %211 = vector.load %arg6[%210, %c0_52, %c0_53] : memref<8x8x32xf32, #tpu.memory_space<vmem>>, vector<1x8x32xf32>
    %212 = vector.shape_cast %211 : vector<1x8x32xf32> to vector<8x32xf32>
    %213 = vector.shape_cast %209 : vector<8x32xf32> to vector<1x8x32xf32>
    tpu.vector_store %arg6[%210, %c0_52, %c0_53], %213 {strides = array<i32>} : memref<8x8x32xf32, #tpu.memory_space<vmem>>, vector<1x8x32xf32>,
    %c8_i32 = arith.constant 8 : i32
    %c0_54 = arith.constant 0 : index
    %c0_55 = arith.constant 0 : index
    %c0_56 = arith.constant 0 : index
    %214 = vector.load %arg4[%c0_54, %c0_55, %c0_56] : memref<2x8x32xf32, #tpu.memory_space<vmem>>, vector<1x8x32xf32>
    %215 = vector.shape_cast %214 : vector<1x8x32xf32> to vector<8x32xf32>
    %216 = vector.shape_cast %209 : vector<8x32xf32> to vector<1x8x32xf32>
    tpu.vector_store %arg4[%c0_54, %c0_55, %c0_56], %216 {strides = array<i32>} : memref<2x8x32xf32, #tpu.memory_space<vmem>>, vector<1x8x32xf32>,
    %c0_57 = arith.constant 0 : index
    %c0_58 = arith.constant 0 : index
    %c0_59 = arith.constant 0 : index
    %217 = vector.load %arg5[%c0_57, %c0_58, %c0_59] : memref<2x8x32xf32, #tpu.memory_space<vmem>>, vector<1x8x32xf32>
    %218 = vector.shape_cast %217 : vector<1x8x32xf32> to vector<8x32xf32>
    %219 = vector.shape_cast %207 : vector<8x32xf32> to vector<1x8x32xf32>
    tpu.vector_store %arg5[%c0_57, %c0_58, %c0_59], %219 {strides = array<i32>} : memref<2x8x32xf32, #tpu.memory_space<vmem>>, vector<1x8x32xf32>,
    %c1 = arith.constant 1 : index
    %c0_60 = arith.constant 0 : index
    %c0_61 = arith.constant 0 : index
    %220 = vector.load %arg1[%c1, %c0_60, %c0_61] : memref<2x64x128xf32, #tpu.memory_space<vmem>>, vector<1x64x128xf32>
    %221 = vector.shape_cast %220 : vector<1x64x128xf32> to vector<64x128xf32>
    %c1_62 = arith.constant 1 : index
    %c0_63 = arith.constant 0 : index
    %c0_64 = arith.constant 0 : index
    %222 = vector.load %arg2[%c1_62, %c0_63, %c0_64] : memref<2x1x128xf32, #tpu.memory_space<vmem>>, vector<1x1x128xf32>
    %223 = vector.shape_cast %222 : vector<1x1x128xf32> to vector<1x128xf32>
    %cst_65 = arith.constant 0.000000e+00 : f32
    %224 = vector.broadcast %cst_65 : f32 to vector<8x32xf32>
    %cst_66 = arith.constant 0.000000e+00 : f32
    %225 = vector.broadcast %cst_66 : f32 to vector<8x32xf32>
    %c0_i32_67 = arith.constant 0 : i32
    %226 = arith.index_cast %c0_i32_67 : i32 to index
    %c0_68 = arith.constant 0 : index
    %c0_69 = arith.constant 0 : index
    %227 = vector.load %arg6[%226, %c0_68, %c0_69] : memref<8x8x32xf32, #tpu.memory_space<vmem>>, vector<1x8x32xf32>
    %228 = vector.shape_cast %227 : vector<1x8x32xf32> to vector<8x32xf32>
    %229 = tpu.concatenate %228, %224 in 1 : vector<8x32xf32>, vector<8x32xf32> -> vector<8x64xf32>
    %cst_70 = arith.constant dense<0.000000e+00> : vector<8x128xf32>
    %230 = tpu.matmul %229, %221, %cst_70 {dimension_numbers = #tpu.dot_dimension_numbers<[1], [0], [0], [1], [0, 0, 1, 1], [], []>} : vector<8x64xf32>, vector<64x128xf32>, vector<8x128xf32> -> vector<8x128xf32>
    %231 = vector.broadcast %223 : vector<1x128xf32> to vector<8x128xf32>
    %232 = arith.addf %230, %231 : vector<8x128xf32>
    %233 = arith.negf %232 : vector<8x128xf32>
    %234 = math.exp %233 : vector<8x128xf32>
    %cst_71 = arith.constant 1.000000e+00 : f32
    %235 = vector.broadcast %cst_71 : f32 to vector<8x128xf32>
    %236 = arith.addf %235, %234 : vector<8x128xf32>
    %237 = arith.divf %235, %236 : vector<8x128xf32>
    %238 = math.tanh %232 : vector<8x128xf32>
    %239 = vector.extract_strided_slice %237 {offsets = [0, 0], sizes = [8, 32], strides = [1, 1]} : vector<8x128xf32> to vector<8x32xf32>
    %240 = vector.extract_strided_slice %237 {offsets = [0, 32], sizes = [8, 32], strides = [1, 1]} : vector<8x128xf32> to vector<8x32xf32>
    %241 = vector.extract_strided_slice %238 {offsets = [0, 64], sizes = [8, 32], strides = [1, 1]} : vector<8x128xf32> to vector<8x32xf32>
    %242 = vector.extract_strided_slice %237 {offsets = [0, 96], sizes = [8, 32], strides = [1, 1]} : vector<8x128xf32> to vector<8x32xf32>
    %243 = arith.mulf %240, %225 : vector<8x32xf32>
    %244 = arith.mulf %239, %241 : vector<8x32xf32>
    %245 = arith.addf %243, %244 : vector<8x32xf32>
    %246 = math.tanh %245 : vector<8x32xf32>
    %247 = arith.mulf %242, %246 : vector<8x32xf32>
    %248 = arith.index_cast %c0_i32_67 : i32 to index
    %c0_72 = arith.constant 0 : index
    %c0_73 = arith.constant 0 : index
    %249 = vector.load %arg6[%248, %c0_72, %c0_73] : memref<8x8x32xf32, #tpu.memory_space<vmem>>, vector<1x8x32xf32>
    %250 = vector.shape_cast %249 : vector<1x8x32xf32> to vector<8x32xf32>
    %251 = vector.shape_cast %247 : vector<8x32xf32> to vector<1x8x32xf32>
    tpu.vector_store %arg6[%248, %c0_72, %c0_73], %251 {strides = array<i32>} : memref<8x8x32xf32, #tpu.memory_space<vmem>>, vector<1x8x32xf32>,
    %c1_i32_74 = arith.constant 1 : i32
    %252 = arith.index_cast %c1_i32_74 : i32 to index
    %c0_75 = arith.constant 0 : index
    %c0_76 = arith.constant 0 : index
    %253 = vector.load %arg6[%252, %c0_75, %c0_76] : memref<8x8x32xf32, #tpu.memory_space<vmem>>, vector<1x8x32xf32>
    %254 = vector.shape_cast %253 : vector<1x8x32xf32> to vector<8x32xf32>
    %255 = tpu.concatenate %254, %247 in 1 : vector<8x32xf32>, vector<8x32xf32> -> vector<8x64xf32>
    %cst_77 = arith.constant dense<0.000000e+00> : vector<8x128xf32>
    %256 = tpu.matmul %255, %221, %cst_77 {dimension_numbers = #tpu.dot_dimension_numbers<[1], [0], [0], [1], [0, 0, 1, 1], [], []>} : vector<8x64xf32>, vector<64x128xf32>, vector<8x128xf32> -> vector<8x128xf32>
    %257 = vector.broadcast %223 : vector<1x128xf32> to vector<8x128xf32>
    %258 = arith.addf %256, %257 : vector<8x128xf32>
    %259 = arith.negf %258 : vector<8x128xf32>
    %260 = math.exp %259 : vector<8x128xf32>
    %cst_78 = arith.constant 1.000000e+00 : f32
    %261 = vector.broadcast %cst_78 : f32 to vector<8x128xf32>
    %262 = arith.addf %261, %260 : vector<8x128xf32>
    %263 = arith.divf %261, %262 : vector<8x128xf32>
    %264 = math.tanh %258 : vector<8x128xf32>
    %265 = vector.extract_strided_slice %263 {offsets = [0, 0], sizes = [8, 32], strides = [1, 1]} : vector<8x128xf32> to vector<8x32xf32>
    %266 = vector.extract_strided_slice %263 {offsets = [0, 32], sizes = [8, 32], strides = [1, 1]} : vector<8x128xf32> to vector<8x32xf32>
    %267 = vector.extract_strided_slice %264 {offsets = [0, 64], sizes = [8, 32], strides = [1, 1]} : vector<8x128xf32> to vector<8x32xf32>
    %268 = vector.extract_strided_slice %263 {offsets = [0, 96], sizes = [8, 32], strides = [1, 1]} : vector<8x128xf32> to vector<8x32xf32>
    %269 = arith.mulf %266, %245 : vector<8x32xf32>
    %270 = arith.mulf %265, %267 : vector<8x32xf32>
    %271 = arith.addf %269, %270 : vector<8x32xf32>
    %272 = math.tanh %271 : vector<8x32xf32>
    %273 = arith.mulf %268, %272 : vector<8x32xf32>
    %274 = arith.index_cast %c1_i32_74 : i32 to index
    %c0_79 = arith.constant 0 : index
    %c0_80 = arith.constant 0 : index
    %275 = vector.load %arg6[%274, %c0_79, %c0_80] : memref<8x8x32xf32, #tpu.memory_space<vmem>>, vector<1x8x32xf32>
    %276 = vector.shape_cast %275 : vector<1x8x32xf32> to vector<8x32xf32>
    %277 = vector.shape_cast %273 : vector<8x32xf32> to vector<1x8x32xf32>
    tpu.vector_store %arg6[%274, %c0_79, %c0_80], %277 {strides = array<i32>} : memref<8x8x32xf32, #tpu.memory_space<vmem>>, vector<1x8x32xf32>,
    %c2_i32_81 = arith.constant 2 : i32
    %278 = arith.index_cast %c2_i32_81 : i32 to index
    %c0_82 = arith.constant 0 : index
    %c0_83 = arith.constant 0 : index
    %279 = vector.load %arg6[%278, %c0_82, %c0_83] : memref<8x8x32xf32, #tpu.memory_space<vmem>>, vector<1x8x32xf32>
    %280 = vector.shape_cast %279 : vector<1x8x32xf32> to vector<8x32xf32>
    %281 = tpu.concatenate %280, %273 in 1 : vector<8x32xf32>, vector<8x32xf32> -> vector<8x64xf32>
    %cst_84 = arith.constant dense<0.000000e+00> : vector<8x128xf32>
    %282 = tpu.matmul %281, %221, %cst_84 {dimension_numbers = #tpu.dot_dimension_numbers<[1], [0], [0], [1], [0, 0, 1, 1], [], []>} : vector<8x64xf32>, vector<64x128xf32>, vector<8x128xf32> -> vector<8x128xf32>
    %283 = vector.broadcast %223 : vector<1x128xf32> to vector<8x128xf32>
    %284 = arith.addf %282, %283 : vector<8x128xf32>
    %285 = arith.negf %284 : vector<8x128xf32>
    %286 = math.exp %285 : vector<8x128xf32>
    %cst_85 = arith.constant 1.000000e+00 : f32
    %287 = vector.broadcast %cst_85 : f32 to vector<8x128xf32>
    %288 = arith.addf %287, %286 : vector<8x128xf32>
    %289 = arith.divf %287, %288 : vector<8x128xf32>
    %290 = math.tanh %284 : vector<8x128xf32>
    %291 = vector.extract_strided_slice %289 {offsets = [0, 0], sizes = [8, 32], strides = [1, 1]} : vector<8x128xf32> to vector<8x32xf32>
    %292 = vector.extract_strided_slice %289 {offsets = [0, 32], sizes = [8, 32], strides = [1, 1]} : vector<8x128xf32> to vector<8x32xf32>
    %293 = vector.extract_strided_slice %290 {offsets = [0, 64], sizes = [8, 32], strides = [1, 1]} : vector<8x128xf32> to vector<8x32xf32>
    %294 = vector.extract_strided_slice %289 {offsets = [0, 96], sizes = [8, 32], strides = [1, 1]} : vector<8x128xf32> to vector<8x32xf32>
    %295 = arith.mulf %292, %271 : vector<8x32xf32>
    %296 = arith.mulf %291, %293 : vector<8x32xf32>
    %297 = arith.addf %295, %296 : vector<8x32xf32>
    %298 = math.tanh %297 : vector<8x32xf32>
    %299 = arith.mulf %294, %298 : vector<8x32xf32>
    %300 = arith.index_cast %c2_i32_81 : i32 to index
    %c0_86 = arith.constant 0 : index
    %c0_87 = arith.constant 0 : index
    %301 = vector.load %arg6[%300, %c0_86, %c0_87] : memref<8x8x32xf32, #tpu.memory_space<vmem>>, vector<1x8x32xf32>
    %302 = vector.shape_cast %301 : vector<1x8x32xf32> to vector<8x32xf32>
    %303 = vector.shape_cast %299 : vector<8x32xf32> to vector<1x8x32xf32>
    tpu.vector_store %arg6[%300, %c0_86, %c0_87], %303 {strides = array<i32>} : memref<8x8x32xf32, #tpu.memory_space<vmem>>, vector<1x8x32xf32>,
    %c3_i32_88 = arith.constant 3 : i32
    %304 = arith.index_cast %c3_i32_88 : i32 to index
    %c0_89 = arith.constant 0 : index
    %c0_90 = arith.constant 0 : index
    %305 = vector.load %arg6[%304, %c0_89, %c0_90] : memref<8x8x32xf32, #tpu.memory_space<vmem>>, vector<1x8x32xf32>
    %306 = vector.shape_cast %305 : vector<1x8x32xf32> to vector<8x32xf32>
    %307 = tpu.concatenate %306, %299 in 1 : vector<8x32xf32>, vector<8x32xf32> -> vector<8x64xf32>
    %cst_91 = arith.constant dense<0.000000e+00> : vector<8x128xf32>
    %308 = tpu.matmul %307, %221, %cst_91 {dimension_numbers = #tpu.dot_dimension_numbers<[1], [0], [0], [1], [0, 0, 1, 1], [], []>} : vector<8x64xf32>, vector<64x128xf32>, vector<8x128xf32> -> vector<8x128xf32>
    %309 = vector.broadcast %223 : vector<1x128xf32> to vector<8x128xf32>
    %310 = arith.addf %308, %309 : vector<8x128xf32>
    %311 = arith.negf %310 : vector<8x128xf32>
    %312 = math.exp %311 : vector<8x128xf32>
    %cst_92 = arith.constant 1.000000e+00 : f32
    %313 = vector.broadcast %cst_92 : f32 to vector<8x128xf32>
    %314 = arith.addf %313, %312 : vector<8x128xf32>
    %315 = arith.divf %313, %314 : vector<8x128xf32>
    %316 = math.tanh %310 : vector<8x128xf32>
    %317 = vector.extract_strided_slice %315 {offsets = [0, 0], sizes = [8, 32], strides = [1, 1]} : vector<8x128xf32> to vector<8x32xf32>
    %318 = vector.extract_strided_slice %315 {offsets = [0, 32], sizes = [8, 32], strides = [1, 1]} : vector<8x128xf32> to vector<8x32xf32>
    %319 = vector.extract_strided_slice %316 {offsets = [0, 64], sizes = [8, 32], strides = [1, 1]} : vector<8x128xf32> to vector<8x32xf32>
    %320 = vector.extract_strided_slice %315 {offsets = [0, 96], sizes = [8, 32], strides = [1, 1]} : vector<8x128xf32> to vector<8x32xf32>
    %321 = arith.mulf %318, %297 : vector<8x32xf32>
    %322 = arith.mulf %317, %319 : vector<8x32xf32>
    %323 = arith.addf %321, %322 : vector<8x32xf32>
    %324 = math.tanh %323 : vector<8x32xf32>
    %325 = arith.mulf %320, %324 : vector<8x32xf32>
    %326 = arith.index_cast %c3_i32_88 : i32 to index
    %c0_93 = arith.constant 0 : index
    %c0_94 = arith.constant 0 : index
    %327 = vector.load %arg6[%326, %c0_93, %c0_94] : memref<8x8x32xf32, #tpu.memory_space<vmem>>, vector<1x8x32xf32>
    %328 = vector.shape_cast %327 : vector<1x8x32xf32> to vector<8x32xf32>
    %329 = vector.shape_cast %325 : vector<8x32xf32> to vector<1x8x32xf32>
    tpu.vector_store %arg6[%326, %c0_93, %c0_94], %329 {strides = array<i32>} : memref<8x8x32xf32, #tpu.memory_space<vmem>>, vector<1x8x32xf32>,
    %c4_i32_95 = arith.constant 4 : i32
    %330 = arith.index_cast %c4_i32_95 : i32 to index
    %c0_96 = arith.constant 0 : index
    %c0_97 = arith.constant 0 : index
    %331 = vector.load %arg6[%330, %c0_96, %c0_97] : memref<8x8x32xf32, #tpu.memory_space<vmem>>, vector<1x8x32xf32>
    %332 = vector.shape_cast %331 : vector<1x8x32xf32> to vector<8x32xf32>
    %333 = tpu.concatenate %332, %325 in 1 : vector<8x32xf32>, vector<8x32xf32> -> vector<8x64xf32>
    %cst_98 = arith.constant dense<0.000000e+00> : vector<8x128xf32>
    %334 = tpu.matmul %333, %221, %cst_98 {dimension_numbers = #tpu.dot_dimension_numbers<[1], [0], [0], [1], [0, 0, 1, 1], [], []>} : vector<8x64xf32>, vector<64x128xf32>, vector<8x128xf32> -> vector<8x128xf32>
    %335 = vector.broadcast %223 : vector<1x128xf32> to vector<8x128xf32>
    %336 = arith.addf %334, %335 : vector<8x128xf32>
    %337 = arith.negf %336 : vector<8x128xf32>
    %338 = math.exp %337 : vector<8x128xf32>
    %cst_99 = arith.constant 1.000000e+00 : f32
    %339 = vector.broadcast %cst_99 : f32 to vector<8x128xf32>
    %340 = arith.addf %339, %338 : vector<8x128xf32>
    %341 = arith.divf %339, %340 : vector<8x128xf32>
    %342 = math.tanh %336 : vector<8x128xf32>
    %343 = vector.extract_strided_slice %341 {offsets = [0, 0], sizes = [8, 32], strides = [1, 1]} : vector<8x128xf32> to vector<8x32xf32>
    %344 = vector.extract_strided_slice %341 {offsets = [0, 32], sizes = [8, 32], strides = [1, 1]} : vector<8x128xf32> to vector<8x32xf32>
    %345 = vector.extract_strided_slice %342 {offsets = [0, 64], sizes = [8, 32], strides = [1, 1]} : vector<8x128xf32> to vector<8x32xf32>
    %346 = vector.extract_strided_slice %341 {offsets = [0, 96], sizes = [8, 32], strides = [1, 1]} : vector<8x128xf32> to vector<8x32xf32>
    %347 = arith.mulf %344, %323 : vector<8x32xf32>
    %348 = arith.mulf %343, %345 : vector<8x32xf32>
    %349 = arith.addf %347, %348 : vector<8x32xf32>
    %350 = math.tanh %349 : vector<8x32xf32>
    %351 = arith.mulf %346, %350 : vector<8x32xf32>
    %352 = arith.index_cast %c4_i32_95 : i32 to index
    %c0_100 = arith.constant 0 : index
    %c0_101 = arith.constant 0 : index
    %353 = vector.load %arg6[%352, %c0_100, %c0_101] : memref<8x8x32xf32, #tpu.memory_space<vmem>>, vector<1x8x32xf32>
    %354 = vector.shape_cast %353 : vector<1x8x32xf32> to vector<8x32xf32>
    %355 = vector.shape_cast %351 : vector<8x32xf32> to vector<1x8x32xf32>
    tpu.vector_store %arg6[%352, %c0_100, %c0_101], %355 {strides = array<i32>} : memref<8x8x32xf32, #tpu.memory_space<vmem>>, vector<1x8x32xf32>,
    %c5_i32_102 = arith.constant 5 : i32
    %356 = arith.index_cast %c5_i32_102 : i32 to index
    %c0_103 = arith.constant 0 : index
    %c0_104 = arith.constant 0 : index
    %357 = vector.load %arg6[%356, %c0_103, %c0_104] : memref<8x8x32xf32, #tpu.memory_space<vmem>>, vector<1x8x32xf32>
    %358 = vector.shape_cast %357 : vector<1x8x32xf32> to vector<8x32xf32>
    %359 = tpu.concatenate %358, %351 in 1 : vector<8x32xf32>, vector<8x32xf32> -> vector<8x64xf32>
    %cst_105 = arith.constant dense<0.000000e+00> : vector<8x128xf32>
    %360 = tpu.matmul %359, %221, %cst_105 {dimension_numbers = #tpu.dot_dimension_numbers<[1], [0], [0], [1], [0, 0, 1, 1], [], []>} : vector<8x64xf32>, vector<64x128xf32>, vector<8x128xf32> -> vector<8x128xf32>
    %361 = vector.broadcast %223 : vector<1x128xf32> to vector<8x128xf32>
    %362 = arith.addf %360, %361 : vector<8x128xf32>
    %363 = arith.negf %362 : vector<8x128xf32>
    %364 = math.exp %363 : vector<8x128xf32>
    %cst_106 = arith.constant 1.000000e+00 : f32
    %365 = vector.broadcast %cst_106 : f32 to vector<8x128xf32>
    %366 = arith.addf %365, %364 : vector<8x128xf32>
    %367 = arith.divf %365, %366 : vector<8x128xf32>
    %368 = math.tanh %362 : vector<8x128xf32>
    %369 = vector.extract_strided_slice %367 {offsets = [0, 0], sizes = [8, 32], strides = [1, 1]} : vector<8x128xf32> to vector<8x32xf32>
    %370 = vector.extract_strided_slice %367 {offsets = [0, 32], sizes = [8, 32], strides = [1, 1]} : vector<8x128xf32> to vector<8x32xf32>
    %371 = vector.extract_strided_slice %368 {offsets = [0, 64], sizes = [8, 32], strides = [1, 1]} : vector<8x128xf32> to vector<8x32xf32>
    %372 = vector.extract_strided_slice %367 {offsets = [0, 96], sizes = [8, 32], strides = [1, 1]} : vector<8x128xf32> to vector<8x32xf32>
    %373 = arith.mulf %370, %349 : vector<8x32xf32>
    %374 = arith.mulf %369, %371 : vector<8x32xf32>
    %375 = arith.addf %373, %374 : vector<8x32xf32>
    %376 = math.tanh %375 : vector<8x32xf32>
    %377 = arith.mulf %372, %376 : vector<8x32xf32>
    %378 = arith.index_cast %c5_i32_102 : i32 to index
    %c0_107 = arith.constant 0 : index
    %c0_108 = arith.constant 0 : index
    %379 = vector.load %arg6[%378, %c0_107, %c0_108] : memref<8x8x32xf32, #tpu.memory_space<vmem>>, vector<1x8x32xf32>
    %380 = vector.shape_cast %379 : vector<1x8x32xf32> to vector<8x32xf32>
    %381 = vector.shape_cast %377 : vector<8x32xf32> to vector<1x8x32xf32>
    tpu.vector_store %arg6[%378, %c0_107, %c0_108], %381 {strides = array<i32>} : memref<8x8x32xf32, #tpu.memory_space<vmem>>, vector<1x8x32xf32>,
    %c6_i32_109 = arith.constant 6 : i32
    %382 = arith.index_cast %c6_i32_109 : i32 to index
    %c0_110 = arith.constant 0 : index
    %c0_111 = arith.constant 0 : index
    %383 = vector.load %arg6[%382, %c0_110, %c0_111] : memref<8x8x32xf32, #tpu.memory_space<vmem>>, vector<1x8x32xf32>
    %384 = vector.shape_cast %383 : vector<1x8x32xf32> to vector<8x32xf32>
    %385 = tpu.concatenate %384, %377 in 1 : vector<8x32xf32>, vector<8x32xf32> -> vector<8x64xf32>
    %cst_112 = arith.constant dense<0.000000e+00> : vector<8x128xf32>
    %386 = tpu.matmul %385, %221, %cst_112 {dimension_numbers = #tpu.dot_dimension_numbers<[1], [0], [0], [1], [0, 0, 1, 1], [], []>} : vector<8x64xf32>, vector<64x128xf32>, vector<8x128xf32> -> vector<8x128xf32>
    %387 = vector.broadcast %223 : vector<1x128xf32> to vector<8x128xf32>
    %388 = arith.addf %386, %387 : vector<8x128xf32>
    %389 = arith.negf %388 : vector<8x128xf32>
    %390 = math.exp %389 : vector<8x128xf32>
    %cst_113 = arith.constant 1.000000e+00 : f32
    %391 = vector.broadcast %cst_113 : f32 to vector<8x128xf32>
    %392 = arith.addf %391, %390 : vector<8x128xf32>
    %393 = arith.divf %391, %392 : vector<8x128xf32>
    %394 = math.tanh %388 : vector<8x128xf32>
    %395 = vector.extract_strided_slice %393 {offsets = [0, 0], sizes = [8, 32], strides = [1, 1]} : vector<8x128xf32> to vector<8x32xf32>
    %396 = vector.extract_strided_slice %393 {offsets = [0, 32], sizes = [8, 32], strides = [1, 1]} : vector<8x128xf32> to vector<8x32xf32>
    %397 = vector.extract_strided_slice %394 {offsets = [0, 64], sizes = [8, 32], strides = [1, 1]} : vector<8x128xf32> to vector<8x32xf32>
    %398 = vector.extract_strided_slice %393 {offsets = [0, 96], sizes = [8, 32], strides = [1, 1]} : vector<8x128xf32> to vector<8x32xf32>
    %399 = arith.mulf %396, %375 : vector<8x32xf32>
    %400 = arith.mulf %395, %397 : vector<8x32xf32>
    %401 = arith.addf %399, %400 : vector<8x32xf32>
    %402 = math.tanh %401 : vector<8x32xf32>
    %403 = arith.mulf %398, %402 : vector<8x32xf32>
    %404 = arith.index_cast %c6_i32_109 : i32 to index
    %c0_114 = arith.constant 0 : index
    %c0_115 = arith.constant 0 : index
    %405 = vector.load %arg6[%404, %c0_114, %c0_115] : memref<8x8x32xf32, #tpu.memory_space<vmem>>, vector<1x8x32xf32>
    %406 = vector.shape_cast %405 : vector<1x8x32xf32> to vector<8x32xf32>
    %407 = vector.shape_cast %403 : vector<8x32xf32> to vector<1x8x32xf32>
    tpu.vector_store %arg6[%404, %c0_114, %c0_115], %407 {strides = array<i32>} : memref<8x8x32xf32, #tpu.memory_space<vmem>>, vector<1x8x32xf32>,
    %c7_i32_116 = arith.constant 7 : i32
    %408 = arith.index_cast %c7_i32_116 : i32 to index
    %c0_117 = arith.constant 0 : index
    %c0_118 = arith.constant 0 : index
    %409 = vector.load %arg6[%408, %c0_117, %c0_118] : memref<8x8x32xf32, #tpu.memory_space<vmem>>, vector<1x8x32xf32>
    %410 = vector.shape_cast %409 : vector<1x8x32xf32> to vector<8x32xf32>
    %411 = tpu.concatenate %410, %403 in 1 : vector<8x32xf32>, vector<8x32xf32> -> vector<8x64xf32>
    %cst_119 = arith.constant dense<0.000000e+00> : vector<8x128xf32>
    %412 = tpu.matmul %411, %221, %cst_119 {dimension_numbers = #tpu.dot_dimension_numbers<[1], [0], [0], [1], [0, 0, 1, 1], [], []>} : vector<8x64xf32>, vector<64x128xf32>, vector<8x128xf32> -> vector<8x128xf32>
    %413 = vector.broadcast %223 : vector<1x128xf32> to vector<8x128xf32>
    %414 = arith.addf %412, %413 : vector<8x128xf32>
    %415 = arith.negf %414 : vector<8x128xf32>
    %416 = math.exp %415 : vector<8x128xf32>
    %cst_120 = arith.constant 1.000000e+00 : f32
    %417 = vector.broadcast %cst_120 : f32 to vector<8x128xf32>
    %418 = arith.addf %417, %416 : vector<8x128xf32>
    %419 = arith.divf %417, %418 : vector<8x128xf32>
    %420 = math.tanh %414 : vector<8x128xf32>
    %421 = vector.extract_strided_slice %419 {offsets = [0, 0], sizes = [8, 32], strides = [1, 1]} : vector<8x128xf32> to vector<8x32xf32>
    %422 = vector.extract_strided_slice %419 {offsets = [0, 32], sizes = [8, 32], strides = [1, 1]} : vector<8x128xf32> to vector<8x32xf32>
    %423 = vector.extract_strided_slice %420 {offsets = [0, 64], sizes = [8, 32], strides = [1, 1]} : vector<8x128xf32> to vector<8x32xf32>
    %424 = vector.extract_strided_slice %419 {offsets = [0, 96], sizes = [8, 32], strides = [1, 1]} : vector<8x128xf32> to vector<8x32xf32>
    %425 = arith.mulf %422, %401 : vector<8x32xf32>
    %426 = arith.mulf %421, %423 : vector<8x32xf32>
    %427 = arith.addf %425, %426 : vector<8x32xf32>
    %428 = math.tanh %427 : vector<8x32xf32>
    %429 = arith.mulf %424, %428 : vector<8x32xf32>
    %430 = arith.index_cast %c7_i32_116 : i32 to index
    %c0_121 = arith.constant 0 : index
    %c0_122 = arith.constant 0 : index
    %431 = vector.load %arg6[%430, %c0_121, %c0_122] : memref<8x8x32xf32, #tpu.memory_space<vmem>>, vector<1x8x32xf32>
    %432 = vector.shape_cast %431 : vector<1x8x32xf32> to vector<8x32xf32>
    %433 = vector.shape_cast %429 : vector<8x32xf32> to vector<1x8x32xf32>
    tpu.vector_store %arg6[%430, %c0_121, %c0_122], %433 {strides = array<i32>} : memref<8x8x32xf32, #tpu.memory_space<vmem>>, vector<1x8x32xf32>,
    %c8_i32_123 = arith.constant 8 : i32
    %c1_124 = arith.constant 1 : index
    %c0_125 = arith.constant 0 : index
    %c0_126 = arith.constant 0 : index
    %434 = vector.load %arg4[%c1_124, %c0_125, %c0_126] : memref<2x8x32xf32, #tpu.memory_space<vmem>>, vector<1x8x32xf32>
    %435 = vector.shape_cast %434 : vector<1x8x32xf32> to vector<8x32xf32>
    %436 = vector.shape_cast %429 : vector<8x32xf32> to vector<1x8x32xf32>
    tpu.vector_store %arg4[%c1_124, %c0_125, %c0_126], %436 {strides = array<i32>} : memref<2x8x32xf32, #tpu.memory_space<vmem>>, vector<1x8x32xf32>,
    %c1_127 = arith.constant 1 : index
    %c0_128 = arith.constant 0 : index
    %c0_129 = arith.constant 0 : index
    %437 = vector.load %arg5[%c1_127, %c0_128, %c0_129] : memref<2x8x32xf32, #tpu.memory_space<vmem>>, vector<1x8x32xf32>
    %438 = vector.shape_cast %437 : vector<1x8x32xf32> to vector<8x32xf32>
    %439 = vector.shape_cast %427 : vector<8x32xf32> to vector<1x8x32xf32>
    tpu.vector_store %arg5[%c1_127, %c0_128, %c0_129], %439 {strides = array<i32>} : memref<2x8x32xf32, #tpu.memory_space<vmem>>, vector<1x8x32xf32>,
    %c0_130 = arith.constant 0 : index
    %c0_131 = arith.constant 0 : index
    %c0_132 = arith.constant 0 : index
    %440 = vector.load %arg6[%c0_130, %c0_131, %c0_132] : memref<8x8x32xf32, #tpu.memory_space<vmem>>, vector<8x8x32xf32>
    %c0_133 = arith.constant 0 : index
    %c0_134 = arith.constant 0 : index
    %c0_135 = arith.constant 0 : index
    %441 = vector.load %arg3[%c0_133, %c0_134, %c0_135] : memref<8x8x32xf32, #tpu.memory_space<vmem>>, vector<8x8x32xf32>
    tpu.vector_store %arg3[%c0_133, %c0_134, %c0_135], %440 {strides = array<i32>} : memref<8x8x32xf32, #tpu.memory_space<vmem>>, vector<8x8x32xf32>,
    return
  }
}

</mosaic_0001>

<llo_original>
// kernel: encoder_forward.1
$region0: #{encoder_forward.1}
  #allocation0 [shape = 'u32[]', space=smem, size = 0x4, offset = 0x4, fixed_abs, tag = 'smem constant byte address 0x4 - core index']
  #allocation1 [shape = 'u32[72,128]{1,0:T(1,128)}', space=vmem, size = 0x9000, scoped, tag = 'internal scratch']
  #allocation2 [shape = 'f32[8,8,32]{2,1,0:T(8,128)}', space=vmem, size = 0x8000, scoped, tag = 'scratch operand']
  %s0 = inlined_call_operand.vmem [shape: f32[8,8,32], index: 0, kind: input, shape index: {}]
  %s1 = inlined_call_operand.vmem [shape: f32[2,64,128], index: 1, kind: input, shape index: {}]
  %s2 = inlined_call_operand.vmem [shape: f32[2,1,128], index: 2, kind: input, shape index: {}]
  %s3 = inlined_call_operand.vmem [shape: f32[8,8,32], index: 3, kind: output, shape index: {0}]
  %s4 = inlined_call_operand.vmem [shape: f32[2,8,32], index: 4, kind: output, shape index: {1}]
  %s5 = inlined_call_operand.vmem [shape: f32[2,8,32], index: 5, kind: output, shape index: {2}]
  %6 = xla_tuple %s3, %s4, %s5
  %s7 = sld [smem:[#allocation0]]
  $region38: #{encoder_forward.1} parent=0
    _
  %s9 = ssub.s32 1, %s7
  %s10 = scalar_select 0, %s9, %s7
  // Predicated region
  $region2: #{encoder_forward.1} parent=0 // pred_check
    _
  $region3: #{encoder_forward.1} parent=0 // pred_check_branch
    %12 = sbr.rel (0) target = $region5
  $region4: #{encoder_forward.1} parent=0 // pred_region
    _
  $region5: #{encoder_forward.1} parent=0 // pred_fallthru
    _
  // Predicated region
  $region6: #{encoder_forward.1} parent=0 // pred_check
    _
  $region7: #{encoder_forward.1} parent=0 // pred_check_branch
    %14 = sbr.rel (0) target = $region9
  $region8: #{encoder_forward.1} parent=0 // pred_region
    _
  $region9: #{encoder_forward.1} parent=0 // pred_fallthru
    _
  // Predicated region
  $region10: #{encoder_forward.1} parent=0 // pred_check
    _
  $region11: #{encoder_forward.1} parent=0 // pred_check_branch
    %16 = sbr.rel (0) target = $region13
  $region12: #{encoder_forward.1} parent=0 // pred_region
    _
  $region13: #{encoder_forward.1} parent=0 // pred_fallthru
    _
  %v17 = vld [vmem:[%s1] sm:$0xff]
  %v18 = vld [vmem:[%s1 + $0x8] sm:$0xff]
  %v19 = vld [vmem:[%s1 + $0x10] sm:$0xff]
  %v20 = vld [vmem:[%s1 + $0x18] sm:$0xff]
  %v21 = vld [vmem:[%s1 + $0x20] sm:$0xff]
  %v22 = vld [vmem:[%s1 + $0x28] sm:$0xff]
  %v23 = vld [vmem:[%s1 + $0x30] sm:$0xff]
  %v24 = vld [vmem:[%s1 + $0x38] sm:$0xff]
  %v25 = vld [vmem:[%s2] sm:$0x1]
  %v26 = vld [vmem:[%s0] sm:$0xff]
  %vm27 = vcmask 261120
  %v28 = vsel %vm27, %v26, 0.0
  %v30 = vperm.slane %v25, 0
  %vm32 = vcmask 523264
  %v34 = vsel %vm32, %v28, 0
  %36 = vmatpush.msra.mxu0 0.0
  %37 = vmatpush.msra.mxu0 0.0
  %38 = vmatpush.msra.mxu0 0.0
  %39 = vmatpush.msra.mxu0 0.0
  %40 = vmatpush.msra.mxu0 0.0
  %41 = vmatpush.msra.mxu0 0.0
  %42 = vmatpush.msra.mxu0 0.0
  %43 = vmatpush.msra.mxu0 0.0
  %44 = vmatpush.msra.mxu0 %v24
  %45 = vmatpush.msra.mxu0 %v23
  %46 = vmatpush.msra.mxu0 %v22
  %47 = vmatpush.msra.mxu0 %v21
  %48 = vmatpush.msra.mxu0 %v20
  %49 = vmatpush.msra.mxu0 %v19
  %50 = vmatpush.msra.mxu0 %v18
  %51 = vmatpush.msra.mxu0 %v17
  %52 = vmatmul.f32.gmra.mxu0 %v34
  %v53 = vpop.f32.mrf.mxu0
  %v54 = vadd.f32 %v30, %v53
  %55 = vdwg.mxu0
  %v56 = vxor.u32 %v54, 2147483648
  %v57 = vmul.f32 %v56, 1.442695
  %v58 = vpow.pop %v57
  %v59 = vadd.f32 %v58, 1.0
  %v60 = vrcp.pop %v59
  %v61 = vmul.f32 %v59, %v60
  %v62 = vsub.f32 1.0, %v61
  %v63 = vmul.f32 %v60, %v62
  %v64 = vadd.f32 %v60, %v63
  %vm65 = vweird.f32 %v59
  %vm66 = vweird.f32 %v60
  %vm67 = vmor %vm65, %vm66
  %v68 = vsel %vm67, %v60, %v64
  %v69 = vand.u32 2147483647, %v59
  %vm70 = vcmp.eq.f32.partialorder %v69, 8.507059e+37
  %v71 = vand.u32 %v59, 2147483648
  %v72 = vor.u32 1.1754944e-38, %v71
  %v73 = vsel %vm70, %v72, %v68
  %v74 = vmul.f32 1.0, %v73
  %v75 = vtanh.pop %v54
  %v76 = vmul.f32 %v74, 0.0
  %78 = vrot.lane.b32.xlu0 %v75, 64
  %v79 = vpop.permute.xlu0 %78
  %v81 = vmul.f32 %v74, %v79
  %83 = vrot.lane.b32.xlu0 %v81, 32
  %v84 = vpop.permute.xlu0 %83
  %v86 = vadd.f32 %v76, %v84
  %v87 = vtanh.pop %v86
  %89 = vrot.lane.b32.xlu0 %v87, 64
  %v90 = vpop.permute.xlu0 %89
  %v92 = vmul.f32 %v74, %v90
  %94 = vrot.lane.b32.xlu0 %v92, 32
  %v95 = vpop.permute.xlu0 %94
  %97 = vst.msk [vmem:[#allocation2] sm:$0xff] %vm27, %v95
  %s98 = scalar_lea.vmem %s0, 8
  %v99 = vld [vmem:[%s98] sm:$0xff]
  %100 = vrot.lane.b32.xlu0 %v92, 64
  %v101 = vpop.permute.xlu0 %100
  %v103 = vsel %vm27, %v99, %v101
  %v105 = vsel %vm32, %v103, 0
  %107 = vmatpush.msra.mxu0 0.0
  %108 = vmatpush.msra.mxu0 0.0
  %109 = vmatpush.msra.mxu0 0.0
  %110 = vmatpush.msra.mxu0 0.0
  %111 = vmatpush.msra.mxu0 0.0
  %112 = vmatpush.msra.mxu0 0.0
  %113 = vmatpush.msra.mxu0 0.0
  %114 = vmatpush.msra.mxu0 0.0
  %115 = vmatpush.msra.mxu0 %v24
  %116 = vmatpush.msra.mxu0 %v23
  %117 = vmatpush.msra.mxu0 %v22
  %118 = vmatpush.msra.mxu0 %v21
  %119 = vmatpush.msra.mxu0 %v20
  %120 = vmatpush.msra.mxu0 %v19
  %121 = vmatpush.msra.mxu0 %v18
  %122 = vmatpush.msra.mxu0 %v17
  %123 = vmatmul.f32.gmra.mxu0 %v105
  %v124 = vpop.f32.mrf.mxu0
  %v125 = vadd.f32 %v30, %v124
  %126 = vdwg.mxu0
  %v127 = vxor.u32 %v125, 2147483648
  %v128 = vmul.f32 %v127, 1.442695
  %v129 = vpow.pop %v128
  %v130 = vadd.f32 %v129, 1.0
  %v131 = vrcp.pop %v130
  %v132 = vmul.f32 %v130, %v131
  %v133 = vsub.f32 1.0, %v132
  %v134 = vmul.f32 %v131, %v133
  %v135 = vadd.f32 %v131, %v134
  %vm136 = vweird.f32 %v130
  %vm137 = vweird.f32 %v131
  %vm138 = vmor %vm136, %vm137
  %v139 = vsel %vm138, %v131, %v135
  %v140 = vand.u32 2147483647, %v130
  %vm141 = vcmp.eq.f32.partialorder %v140, 8.507059e+37
  %v142 = vand.u32 %v130, 2147483648
  %v143 = vor.u32 1.1754944e-38, %v142
  %v144 = vsel %vm141, %v143, %v139
  %v145 = vmul.f32 1.0, %v144
  %v146 = vtanh.pop %v125
  %v147 = vmul.f32 %v145, %v86
  %149 = vrot.lane.b32.xlu0 %v146, 64
  %v150 = vpop.permute.xlu0 %149
  %v152 = vmul.f32 %v145, %v150
  %154 = vrot.lane.b32.xlu0 %v152, 32
  %v155 = vpop.permute.xlu0 %154
  %v157 = vadd.f32 %v147, %v155
  %v158 = vtanh.pop %v157
  %160 = vrot.lane.b32.xlu0 %v158, 64
  %v161 = vpop.permute.xlu0 %160
  %v163 = vmul.f32 %v145, %v161
  %165 = vrot.lane.b32.xlu0 %v163, 32
  %v166 = vpop.permute.xlu0 %165
  %s168 = scalar_lea.vmem [#allocation2], 8
  %169 = vst.msk [vmem:[%s168] sm:$0xff] %vm27, %v166
  %s170 = scalar_lea.vmem %s0, 16
  %v171 = vld [vmem:[%s170] sm:$0xff]
  %172 = vrot.lane.b32.xlu0 %v163, 64
  %v173 = vpop.permute.xlu0 %172
  %v175 = vsel %vm27, %v171, %v173
  %v177 = vsel %vm32, %v175, 0
  %179 = vmatpush.msra.mxu0 0.0
  %180 = vmatpush.msra.mxu0 0.0
  %181 = vmatpush.msra.mxu0 0.0
  %182 = vmatpush.msra.mxu0 0.0
  %183 = vmatpush.msra.mxu0 0.0
  %184 = vmatpush.msra.mxu0 0.0
  %185 = vmatpush.msra.mxu0 0.0
  %186 = vmatpush.msra.mxu0 0.0
  %187 = vmatpush.msra.mxu0 %v24
  %188 = vmatpush.msra.mxu0 %v23
  %189 = vmatpush.msra.mxu0 %v22
  %190 = vmatpush.msra.mxu0 %v21
  %191 = vmatpush.msra.mxu0 %v20
  %192 = vmatpush.msra.mxu0 %v19
  %193 = vmatpush.msra.mxu0 %v18
  %194 = vmatpush.msra.mxu0 %v17
  %195 = vmatmul.f32.gmra.mxu0 %v177
  %v196 = vpop.f32.mrf.mxu0
  %v197 = vadd.f32 %v30, %v196
  %198 = vdwg.mxu0
  %v199 = vxor.u32 %v197, 2147483648
  %v200 = vmul.f32 %v199, 1.442695
  %v201 = vpow.pop %v200
  %v202 = vadd.f32 %v201, 1.0
  %v203 = vrcp.pop %v202
  %v204 = vmul.f32 %v202, %v203
  %v205 = vsub.f32 1.0, %v204
  %v206 = vmul.f32 %v203, %v205
  %v207 = vadd.f32 %v203, %v206
  %vm208 = vweird.f32 %v202
  %vm209 = vweird.f32 %v203
  %vm210 = vmor %vm208, %vm209
  %v211 = vsel %vm210, %v203, %v207
  %v212 = vand.u32 2147483647, %v202
  %vm213 = vcmp.eq.f32.partialorder %v212, 8.507059e+37
  %v214 = vand.u32 %v202, 2147483648
  %v215 = vor.u32 1.1754944e-38, %v214
  %v216 = vsel %vm213, %v215, %v211
  %v217 = vmul.f32 1.0, %v216
  %v218 = vtanh.pop %v197
  %v219 = vmul.f32 %v217, %v157
  %221 = vrot.lane.b32.xlu0 %v218, 64
  %v222 = vpop.permute.xlu0 %221
  %v224 = vmul.f32 %v217, %v222
  %226 = vrot.lane.b32.xlu0 %v224, 32
  %v227 = vpop.permute.xlu0 %226
  %v229 = vadd.f32 %v219, %v227
  %v230 = vtanh.pop %v229
  %232 = vrot.lane.b32.xlu0 %v230, 64
  %v233 = vpop.permute.xlu0 %232
  %v235 = vmul.f32 %v217, %v233
  %237 = vrot.lane.b32.xlu0 %v235, 32
  %v238 = vpop.permute.xlu0 %237
  %s240 = scalar_lea.vmem [#allocation2], 16
  %241 = vst.msk [vmem:[%s240] sm:$0xff] %vm27, %v238
  %s242 = scalar_lea.vmem %s0, 24
  %v243 = vld [vmem:[%s242] sm:$0xff]
  %244 = vrot.lane.b32.xlu0 %v235, 64
  %v245 = vpop.permute.xlu0 %244
  %v247 = vsel %vm27, %v243, %v245
  %v249 = vsel %vm32, %v247, 0
  %251 = vmatpush.msra.mxu0 0.0
  %252 = vmatpush.msra.mxu0 0.0
  %253 = vmatpush.msra.mxu0 0.0
  %254 = vmatpush.msra.mxu0 0.0
  %255 = vmatpush.msra.mxu0 0.0
  %256 = vmatpush.msra.mxu0 0.0
  %257 = vmatpush.msra.mxu0 0.0
  %258 = vmatpush.msra.mxu0 0.0
  %259 = vmatpush.msra.mxu0 %v24
  %260 = vmatpush.msra.mxu0 %v23
  %261 = vmatpush.msra.mxu0 %v22
  %262 = vmatpush.msra.mxu0 %v21
  %263 = vmatpush.msra.mxu0 %v20
  %264 = vmatpush.msra.mxu0 %v19
  %265 = vmatpush.msra.mxu0 %v18
  %266 = vmatpush.msra.mxu0 %v17
  %267 = vmatmul.f32.gmra.mxu0 %v249
  %v268 = vpop.f32.mrf.mxu0
  %v269 = vadd.f32 %v30, %v268
  %270 = vdwg.mxu0
  %v271 = vxor.u32 %v269, 2147483648
  %v272 = vmul.f32 %v271, 1.442695
  %v273 = vpow.pop %v272
  %v274 = vadd.f32 %v273, 1.0
  %v275 = vrcp.pop %v274
  %v276 = vmul.f32 %v274, %v275
  %v277 = vsub.f32 1.0, %v276
  %v278 = vmul.f32 %v275, %v277
  %v279 = vadd.f32 %v275, %v278
  %vm280 = vweird.f32 %v274
  %vm281 = vweird.f32 %v275
  %vm282 = vmor %vm280, %vm281
  %v283 = vsel %vm282, %v275, %v279
  %v284 = vand.u32 2147483647, %v274
  %vm285 = vcmp.eq.f32.partialorder %v284, 8.507059e+37
  %v286 = vand.u32 %v274, 2147483648
  %v287 = vor.u32 1.1754944e-38, %v286
  %v288 = vsel %vm285, %v287, %v283
  %v289 = vmul.f32 1.0, %v288
  %v290 = vtanh.pop %v269
  %v291 = vmul.f32 %v289, %v229
  %293 = vrot.lane.b32.xlu0 %v290, 64
  %v294 = vpop.permute.xlu0 %293
  %v296 = vmul.f32 %v289, %v294
  %298 = vrot.lane.b32.xlu0 %v296, 32
  %v299 = vpop.permute.xlu0 %298
  %v301 = vadd.f32 %v291, %v299
  %v302 = vtanh.pop %v301
  %304 = vrot.lane.b32.xlu0 %v302, 64
  %v305 = vpop.permute.xlu0 %304
  %v307 = vmul.f32 %v289, %v305
  %309 = vrot.lane.b32.xlu0 %v307, 32
  %v310 = vpop.permute.xlu0 %309
  %s312 = scalar_lea.vmem [#allocation2], 24
  %313 = vst.msk [vmem:[%s312] sm:$0xff] %vm27, %v310
  %s314 = scalar_lea.vmem %s0, 32
  %v315 = vld [vmem:[%s314] sm:$0xff]
  %316 = vrot.lane.b32.xlu0 %v307, 64
  %v317 = vpop.permute.xlu0 %316
  %v319 = vsel %vm27, %v315, %v317
  %v321 = vsel %vm32, %v319, 0
  %323 = vmatpush.msra.mxu0 0.0
  %324 = vmatpush.msra.mxu0 0.0
  %325 = vmatpush.msra.mxu0 0.0
  %326 = vmatpush.msra.mxu0 0.0
  %327 = vmatpush.msra.mxu0 0.0
  %328 = vmatpush.msra.mxu0 0.0
  %329 = vmatpush.msra.mxu0 0.0
  %330 = vmatpush.msra.mxu0 0.0
  %331 = vmatpush.msra.mxu0 %v24
  %332 = vmatpush.msra.mxu0 %v23
  %333 = vmatpush.msra.mxu0 %v22
  %334 = vmatpush.msra.mxu0 %v21
  %335 = vmatpush.msra.mxu0 %v20
  %336 = vmatpush.msra.mxu0 %v19
  %337 = vmatpush.msra.mxu0 %v18
  %338 = vmatpush.msra.mxu0 %v17
  %339 = vmatmul.f32.gmra.mxu0 %v321
  %v340 = vpop.f32.mrf.mxu0
  %v341 = vadd.f32 %v30, %v340
  %342 = vdwg.mxu0
  %v343 = vxor.u32 %v341, 2147483648
  %v344 = vmul.f32 %v343, 1.442695
  %v345 = vpow.pop %v344
  %v346 = vadd.f32 %v345, 1.0
  %v347 = vrcp.pop %v346
  %v348 = vmul.f32 %v346, %v347
  %v349 = vsub.f32 1.0, %v348
  %v350 = vmul.f32 %v347, %v349
  %v351 = vadd.f32 %v347, %v350
  %vm352 = vweird.f32 %v346
  %vm353 = vweird.f32 %v347
  %vm354 = vmor %vm352, %vm353
  %v355 = vsel %vm354, %v347, %v351
  %v356 = vand.u32 2147483647, %v346
  %vm357 = vcmp.eq.f32.partialorder %v356, 8.507059e+37
  %v358 = vand.u32 %v346, 2147483648
  %v359 = vor.u32 1.1754944e-38, %v358
  %v360 = vsel %vm357, %v359, %v355
  %v361 = vmul.f32 1.0, %v360
  %v362 = vtanh.pop %v341
  %v363 = vmul.f32 %v361, %v301
  %365 = vrot.lane.b32.xlu0 %v362, 64
  %v366 = vpop.permute.xlu0 %365
  %v368 = vmul.f32 %v361, %v366
  %370 = vrot.lane.b32.xlu0 %v368, 32
  %v371 = vpop.permute.xlu0 %370
  %v373 = vadd.f32 %v363, %v371
  %v374 = vtanh.pop %v373
  %376 = vrot.lane.b32.xlu0 %v374, 64
  %v377 = vpop.permute.xlu0 %376
  %v379 = vmul.f32 %v361, %v377
  %381 = vrot.lane.b32.xlu0 %v379, 32
  %v382 = vpop.permute.xlu0 %381
  %s384 = scalar_lea.vmem [#allocation2], 32
  %385 = vst.msk [vmem:[%s384] sm:$0xff] %vm27, %v382
  %s386 = scalar_lea.vmem %s0, 40
  %v387 = vld [vmem:[%s386] sm:$0xff]
  %388 = vrot.lane.b32.xlu0 %v379, 64
  %v389 = vpop.permute.xlu0 %388
  %v391 = vsel %vm27, %v387, %v389
  %v393 = vsel %vm32, %v391, 0
  %395 = vmatpush.msra.mxu0 0.0
  %396 = vmatpush.msra.mxu0 0.0
  %397 = vmatpush.msra.mxu0 0.0
  %398 = vmatpush.msra.mxu0 0.0
  %399 = vmatpush.msra.mxu0 0.0
  %400 = vmatpush.msra.mxu0 0.0
  %401 = vmatpush.msra.mxu0 0.0
  %402 = vmatpush.msra.mxu0 0.0
  %403 = vmatpush.msra.mxu0 %v24
  %404 = vmatpush.msra.mxu0 %v23
  %405 = vmatpush.msra.mxu0 %v22
  %406 = vmatpush.msra.mxu0 %v21
  %407 = vmatpush.msra.mxu0 %v20
  %408 = vmatpush.msra.mxu0 %v19
  %409 = vmatpush.msra.mxu0 %v18
  %410 = vmatpush.msra.mxu0 %v17
  %411 = vmatmul.f32.gmra.mxu0 %v393
  %v412 = vpop.f32.mrf.mxu0
  %v413 = vadd.f32 %v30, %v412
  %414 = vdwg.mxu0
  %v415 = vxor.u32 %v413, 2147483648
  %v416 = vmul.f32 %v415, 1.442695
  %v417 = vpow.pop %v416
  %v418 = vadd.f32 %v417, 1.0
  %v419 = vrcp.pop %v418
  %v420 = vmul.f32 %v418, %v419
  %v421 = vsub.f32 1.0, %v420
  %v422 = vmul.f32 %v419, %v421
  %v423 = vadd.f32 %v419, %v422
  %vm424 = vweird.f32 %v418
  %vm425 = vweird.f32 %v419
  %vm426 = vmor %vm424, %vm425
  %v427 = vsel %vm426, %v419, %v423
  %v428 = vand.u32 2147483647, %v418
  %vm429 = vcmp.eq.f32.partialorder %v428, 8.507059e+37
  %v430 = vand.u32 %v418, 2147483648
  %v431 = vor.u32 1.1754944e-38, %v430
  %v432 = vsel %vm429, %v431, %v427
  %v433 = vmul.f32 1.0, %v432
  %v434 = vtanh.pop %v413
  %v435 = vmul.f32 %v433, %v373
  %437 = vrot.lane.b32.xlu0 %v434, 64
  %v438 = vpop.permute.xlu0 %437
  %v440 = vmul.f32 %v433, %v438
  %442 = vrot.lane.b32.xlu0 %v440, 32
  %v443 = vpop.permute.xlu0 %442
  %v445 = vadd.f32 %v435, %v443
  %v446 = vtanh.pop %v445
  %448 = vrot.lane.b32.xlu0 %v446, 64
  %v449 = vpop.permute.xlu0 %448
  %v451 = vmul.f32 %v433, %v449
  %453 = vrot.lane.b32.xlu0 %v451, 32
  %v454 = vpop.permute.xlu0 %453
  %s456 = scalar_lea.vmem [#allocation2], 40
  %457 = vst.msk [vmem:[%s456] sm:$0xff] %vm27, %v454
  %s458 = scalar_lea.vmem %s0, 48
  %v459 = vld [vmem:[%s458] sm:$0xff]
  %460 = vrot.lane.b32.xlu0 %v451, 64
  %v461 = vpop.permute.xlu0 %460
  %v463 = vsel %vm27, %v459, %v461
  %v465 = vsel %vm32, %v463, 0
  %467 = vmatpush.msra.mxu0 0.0
  %468 = vmatpush.msra.mxu0 0.0
  %469 = vmatpush.msra.mxu0 0.0
  %470 = vmatpush.msra.mxu0 0.0
  %471 = vmatpush.msra.mxu0 0.0
  %472 = vmatpush.msra.mxu0 0.0
  %473 = vmatpush.msra.mxu0 0.0
  %474 = vmatpush.msra.mxu0 0.0
  %475 = vmatpush.msra.mxu0 %v24
  %476 = vmatpush.msra.mxu0 %v23
  %477 = vmatpush.msra.mxu0 %v22
  %478 = vmatpush.msra.mxu0 %v21
  %479 = vmatpush.msra.mxu0 %v20
  %480 = vmatpush.msra.mxu0 %v19
  %481 = vmatpush.msra.mxu0 %v18
  %482 = vmatpush.msra.mxu0 %v17
  %483 = vmatmul.f32.gmra.mxu0 %v465
  %v484 = vpop.f32.mrf.mxu0
  %v485 = vadd.f32 %v30, %v484
  %486 = vdwg.mxu0
  %v487 = vxor.u32 %v485, 2147483648
  %v488 = vmul.f32 %v487, 1.442695
  %v489 = vpow.pop %v488
  %v490 = vadd.f32 %v489, 1.0
  %v491 = vrcp.pop %v490
  %v492 = vmul.f32 %v490, %v491
  %v493 = vsub.f32 1.0, %v492
  %v494 = vmul.f32 %v491, %v493
  %v495 = vadd.f32 %v491, %v494
  %vm496 = vweird.f32 %v490
  %vm497 = vweird.f32 %v491
  %vm498 = vmor %vm496, %vm497
  %v499 = vsel %vm498, %v491, %v495
  %v500 = vand.u32 2147483647, %v490
  %vm501 = vcmp.eq.f32.partialorder %v500, 8.507059e+37
  %v502 = vand.u32 %v490, 2147483648
  %v503 = vor.u32 1.1754944e-38, %v502
  %v504 = vsel %vm501, %v503, %v499
  %v505 = vmul.f32 1.0, %v504
  %v506 = vtanh.pop %v485
  %v507 = vmul.f32 %v505, %v445
  %509 = vrot.lane.b32.xlu0 %v506, 64
  %v510 = vpop.permute.xlu0 %509
  %v512 = vmul.f32 %v505, %v510
  %514 = vrot.lane.b32.xlu0 %v512, 32
  %v515 = vpop.permute.xlu0 %514
  %v517 = vadd.f32 %v507, %v515
  %v518 = vtanh.pop %v517
  %520 = vrot.lane.b32.xlu0 %v518, 64
  %v521 = vpop.permute.xlu0 %520
  %v523 = vmul.f32 %v505, %v521
  %525 = vrot.lane.b32.xlu0 %v523, 32
  %v526 = vpop.permute.xlu0 %525
  %s528 = scalar_lea.vmem [#allocation2], 48
  %529 = vst.msk [vmem:[%s528] sm:$0xff] %vm27, %v526
  %s530 = scalar_lea.vmem %s0, 56
  %v531 = vld [vmem:[%s530] sm:$0xff]
  %532 = vrot.lane.b32.xlu0 %v523, 64
  %v533 = vpop.permute.xlu0 %532
  %v535 = vsel %vm27, %v531, %v533
  %v537 = vsel %vm32, %v535, 0
  %539 = vmatpush.msra.mxu0 0.0
  %540 = vmatpush.msra.mxu0 0.0
  %541 = vmatpush.msra.mxu0 0.0
  %542 = vmatpush.msra.mxu0 0.0
  %543 = vmatpush.msra.mxu0 0.0
  %544 = vmatpush.msra.mxu0 0.0
  %545 = vmatpush.msra.mxu0 0.0
  %546 = vmatpush.msra.mxu0 0.0
  %547 = vmatpush.msra.mxu0 %v24
  %548 = vmatpush.msra.mxu0 %v23
  %549 = vmatpush.msra.mxu0 %v22
  %550 = vmatpush.msra.mxu0 %v21
  %551 = vmatpush.msra.mxu0 %v20
  %552 = vmatpush.msra.mxu0 %v19
  %553 = vmatpush.msra.mxu0 %v18
  %554 = vmatpush.msra.mxu0 %v17
  %555 = vmatmul.f32.gmra.mxu0 %v537
  %v556 = vpop.f32.mrf.mxu0
  %v557 = vadd.f32 %v30, %v556
  %558 = vdwg.mxu0
  %v559 = vxor.u32 %v557, 2147483648
  %v560 = vmul.f32 %v559, 1.442695
  %v561 = vpow.pop %v560
  %v562 = vadd.f32 %v561, 1.0
  %v563 = vrcp.pop %v562
  %v564 = vmul.f32 %v562, %v563
  %v565 = vsub.f32 1.0, %v564
  %v566 = vmul.f32 %v563, %v565
  %v567 = vadd.f32 %v563, %v566
  %vm568 = vweird.f32 %v562
  %vm569 = vweird.f32 %v563
  %vm570 = vmor %vm568, %vm569
  %v571 = vsel %vm570, %v563, %v567
  %v572 = vand.u32 2147483647, %v562
  %vm573 = vcmp.eq.f32.partialorder %v572, 8.507059e+37
  %v574 = vand.u32 %v562, 2147483648
  %v575 = vor.u32 1.1754944e-38, %v574
  %v576 = vsel %vm573, %v575, %v571
  %v577 = vmul.f32 1.0, %v576
  %v578 = vtanh.pop %v557
  %v579 = vmul.f32 %v577, %v517
  %581 = vrot.lane.b32.xlu0 %v578, 64
  %v582 = vpop.permute.xlu0 %581
  %v584 = vmul.f32 %v577, %v582
  %586 = vrot.lane.b32.xlu0 %v584, 32
  %v587 = vpop.permute.xlu0 %586
  %v589 = vadd.f32 %v579, %v587
  %v590 = vtanh.pop %v589
  %592 = vrot.lane.b32.xlu0 %v590, 64
  %v593 = vpop.permute.xlu0 %592
  %v595 = vmul.f32 %v577, %v593
  %597 = vrot.lane.b32.xlu0 %v595, 32
  %v598 = vpop.permute.xlu0 %597
  %s600 = scalar_lea.vmem [#allocation2], 56
  %601 = vst.msk [vmem:[%s600] sm:$0xff] %vm27, %v598
  %602 = vst.msk [vmem:[%s4] sm:$0xff] %vm27, %v598
  %604 = vrot.lane.b32.xlu0 %v589, 96
  %v605 = vpop.permute.xlu0 %604
  %607 = vst.msk [vmem:[%s5] sm:$0xff] %vm27, %v605
  %s608 = scalar_lea.vmem %s1, 64
  %v609 = vld [vmem:[%s608] sm:$0xff]
  %v610 = vld [vmem:[%s608 + $0x8] sm:$0xff]
  %v611 = vld [vmem:[%s608 + $0x10] sm:$0xff]
  %v612 = vld [vmem:[%s608 + $0x18] sm:$0xff]
  %v613 = vld [vmem:[%s608 + $0x20] sm:$0xff]
  %v614 = vld [vmem:[%s608 + $0x28] sm:$0xff]
  %v615 = vld [vmem:[%s608 + $0x30] sm:$0xff]
  %v616 = vld [vmem:[%s608 + $0x38] sm:$0xff]
  %s617 = scalar_lea.vmem %s2, 1
  %v618 = vld [vmem:[%s617] sm:$0x1]
  %v619 = vld [vmem:[#allocation2] sm:$0xff]
  %v620 = vsel %vm27, %v619, 0.0
  %v622 = vperm.slane %v618, 0
  %v625 = vsel %vm32, %v620, 0
  %627 = vmatpush.msra.mxu0 0.0
  %628 = vmatpush.msra.mxu0 0.0
  %629 = vmatpush.msra.mxu0 0.0
  %630 = vmatpush.msra.mxu0 0.0
  %631 = vmatpush.msra.mxu0 0.0
  %632 = vmatpush.msra.mxu0 0.0
  %633 = vmatpush.msra.mxu0 0.0
  %634 = vmatpush.msra.mxu0 0.0
  %635 = vmatpush.msra.mxu0 %v616
  %636 = vmatpush.msra.mxu0 %v615
  %637 = vmatpush.msra.mxu0 %v614
  %638 = vmatpush.msra.mxu0 %v613
  %639 = vmatpush.msra.mxu0 %v612
  %640 = vmatpush.msra.mxu0 %v611
  %641 = vmatpush.msra.mxu0 %v610
  %642 = vmatpush.msra.mxu0 %v609
  %643 = vmatmul.f32.gmra.mxu0 %v625
  %v644 = vpop.f32.mrf.mxu0
  %v645 = vadd.f32 %v622, %v644
  %646 = vdwg.mxu0
  %v647 = vxor.u32 %v645, 2147483648
  %v648 = vmul.f32 %v647, 1.442695
  %v649 = vpow.pop %v648
  %v650 = vadd.f32 %v649, 1.0
  %v651 = vrcp.pop %v650
  %v652 = vmul.f32 %v650, %v651
  %v653 = vsub.f32 1.0, %v652
  %v654 = vmul.f32 %v651, %v653
  %v655 = vadd.f32 %v651, %v654
  %vm656 = vweird.f32 %v650
  %vm657 = vweird.f32 %v651
  %vm658 = vmor %vm656, %vm657
  %v659 = vsel %vm658, %v651, %v655
  %v660 = vand.u32 2147483647, %v650
  %vm661 = vcmp.eq.f32.partialorder %v660, 8.507059e+37
  %v662 = vand.u32 %v650, 2147483648
  %v663 = vor.u32 1.1754944e-38, %v662
  %v664 = vsel %vm661, %v663, %v659
  %v665 = vmul.f32 1.0, %v664
  %v666 = vtanh.pop %v645
  %v667 = vmul.f32 %v665, 0.0
  %669 = vrot.lane.b32.xlu0 %v666, 64
  %v670 = vpop.permute.xlu0 %669
  %v672 = vmul.f32 %v665, %v670
  %674 = vrot.lane.b32.xlu0 %v672, 32
  %v675 = vpop.permute.xlu0 %674
  %v677 = vadd.f32 %v667, %v675
  %v678 = vtanh.pop %v677
  %680 = vrot.lane.b32.xlu0 %v678, 64
  %v681 = vpop.permute.xlu0 %680
  %v683 = vmul.f32 %v665, %v681
  %685 = vrot.lane.b32.xlu0 %v683, 32
  %v686 = vpop.permute.xlu0 %685
  %688 = vst.msk [vmem:[#allocation2] sm:$0xff] %vm27, %v686
  %v689 = vld [vmem:[%s168] sm:$0xff]
  %690 = vrot.lane.b32.xlu0 %v683, 64
  %v691 = vpop.permute.xlu0 %690
  %v693 = vsel %vm27, %v689, %v691
  %v695 = vsel %vm32, %v693, 0
  %697 = vmatpush.msra.mxu0 0.0
  %698 = vmatpush.msra.mxu0 0.0
  %699 = vmatpush.msra.mxu0 0.0
  %700 = vmatpush.msra.mxu0 0.0
  %701 = vmatpush.msra.mxu0 0.0
  %702 = vmatpush.msra.mxu0 0.0
  %703 = vmatpush.msra.mxu0 0.0
  %704 = vmatpush.msra.mxu0 0.0
  %705 = vmatpush.msra.mxu0 %v616
  %706 = vmatpush.msra.mxu0 %v615
  %707 = vmatpush.msra.mxu0 %v614
  %708 = vmatpush.msra.mxu0 %v613
  %709 = vmatpush.msra.mxu0 %v612
  %710 = vmatpush.msra.mxu0 %v611
  %711 = vmatpush.msra.mxu0 %v610
  %712 = vmatpush.msra.mxu0 %v609
  %713 = vmatmul.f32.gmra.mxu0 %v695
  %v714 = vpop.f32.mrf.mxu0
  %v715 = vadd.f32 %v622, %v714
  %716 = vdwg.mxu0
  %v717 = vxor.u32 %v715, 2147483648
  %v718 = vmul.f32 %v717, 1.442695
  %v719 = vpow.pop %v718
  %v720 = vadd.f32 %v719, 1.0
  %v721 = vrcp.pop %v720
  %v722 = vmul.f32 %v720, %v721
  %v723 = vsub.f32 1.0, %v722
  %v724 = vmul.f32 %v721, %v723
  %v725 = vadd.f32 %v721, %v724
  %vm726 = vweird.f32 %v720
  %vm727 = vweird.f32 %v721
  %vm728 = vmor %vm726, %vm727
  %v729 = vsel %vm728, %v721, %v725
  %v730 = vand.u32 2147483647, %v720
  %vm731 = vcmp.eq.f32.partialorder %v730, 8.507059e+37
  %v732 = vand.u32 %v720, 2147483648
  %v733 = vor.u32 1.1754944e-38, %v732
  %v734 = vsel %vm731, %v733, %v729
  %v735 = vmul.f32 1.0, %v734
  %v736 = vtanh.pop %v715
  %v737 = vmul.f32 %v735, %v677
  %739 = vrot.lane.b32.xlu0 %v736, 64
  %v740 = vpop.permute.xlu0 %739
  %v742 = vmul.f32 %v735, %v740
  %744 = vrot.lane.b32.xlu0 %v742, 32
  %v745 = vpop.permute.xlu0 %744
  %v747 = vadd.f32 %v737, %v745
  %v748 = vtanh.pop %v747
  %750 = vrot.lane.b32.xlu0 %v748, 64
  %v751 = vpop.permute.xlu0 %750
  %v753 = vmul.f32 %v735, %v751
  %755 = vrot.lane.b32.xlu0 %v753, 32
  %v756 = vpop.permute.xlu0 %755
  %758 = vst.msk [vmem:[%s168] sm:$0xff] %vm27, %v756
  %v759 = vld [vmem:[%s240] sm:$0xff]
  %760 = vrot.lane.b32.xlu0 %v753, 64
  %v761 = vpop.permute.xlu0 %760
  %v763 = vsel %vm27, %v759, %v761
  %v765 = vsel %vm32, %v763, 0
  %767 = vmatpush.msra.mxu0 0.0
  %768 = vmatpush.msra.mxu0 0.0
  %769 = vmatpush.msra.mxu0 0.0
  %770 = vmatpush.msra.mxu0 0.0
  %771 = vmatpush.msra.mxu0 0.0
  %772 = vmatpush.msra.mxu0 0.0
  %773 = vmatpush.msra.mxu0 0.0
  %774 = vmatpush.msra.mxu0 0.0
  %775 = vmatpush.msra.mxu0 %v616
  %776 = vmatpush.msra.mxu0 %v615
  %777 = vmatpush.msra.mxu0 %v614
  %778 = vmatpush.msra.mxu0 %v613
  %779 = vmatpush.msra.mxu0 %v612
  %780 = vmatpush.msra.mxu0 %v611
  %781 = vmatpush.msra.mxu0 %v610
  %782 = vmatpush.msra.mxu0 %v609
  %783 = vmatmul.f32.gmra.mxu0 %v765
  %v784 = vpop.f32.mrf.mxu0
  %v785 = vadd.f32 %v622, %v784
  %786 = vdwg.mxu0
  %v787 = vxor.u32 %v785, 2147483648
  %v788 = vmul.f32 %v787, 1.442695
  %v789 = vpow.pop %v788
  %v790 = vadd.f32 %v789, 1.0
  %v791 = vrcp.pop %v790
  %v792 = vmul.f32 %v790, %v791
  %v793 = vsub.f32 1.0, %v792
  %v794 = vmul.f32 %v791, %v793
  %v795 = vadd.f32 %v791, %v794
  %vm796 = vweird.f32 %v790
  %vm797 = vweird.f32 %v791
  %vm798 = vmor %vm796, %vm797
  %v799 = vsel %vm798, %v791, %v795
  %v800 = vand.u32 2147483647, %v790
  %vm801 = vcmp.eq.f32.partialorder %v800, 8.507059e+37
  %v802 = vand.u32 %v790, 2147483648
  %v803 = vor.u32 1.1754944e-38, %v802
  %v804 = vsel %vm801, %v803, %v799
  %v805 = vmul.f32 1.0, %v804
  %v806 = vtanh.pop %v785
  %v807 = vmul.f32 %v805, %v747
  %809 = vrot.lane.b32.xlu0 %v806, 64
  %v810 = vpop.permute.xlu0 %809
  %v812 = vmul.f32 %v805, %v810
  %814 = vrot.lane.b32.xlu0 %v812, 32
  %v815 = vpop.permute.xlu0 %814
  %v817 = vadd.f32 %v807, %v815
  %v818 = vtanh.pop %v817
  %820 = vrot.lane.b32.xlu0 %v818, 64
  %v821 = vpop.permute.xlu0 %820
  %v823 = vmul.f32 %v805, %v821
  %825 = vrot.lane.b32.xlu0 %v823, 32
  %v826 = vpop.permute.xlu0 %825
  %828 = vst.msk [vmem:[%s240] sm:$0xff] %vm27, %v826
  %v829 = vld [vmem:[%s312] sm:$0xff]
  %830 = vrot.lane.b32.xlu0 %v823, 64
  %v831 = vpop.permute.xlu0 %830
  %v833 = vsel %vm27, %v829, %v831
  %v835 = vsel %vm32, %v833, 0
  %837 = vmatpush.msra.mxu0 0.0
  %838 = vmatpush.msra.mxu0 0.0
  %839 = vmatpush.msra.mxu0 0.0
  %840 = vmatpush.msra.mxu0 0.0
  %841 = vmatpush.msra.mxu0 0.0
  %842 = vmatpush.msra.mxu0 0.0
  %843 = vmatpush.msra.mxu0 0.0
  %844 = vmatpush.msra.mxu0 0.0
  %845 = vmatpush.msra.mxu0 %v616
  %846 = vmatpush.msra.mxu0 %v615
  %847 = vmatpush.msra.mxu0 %v614
  %848 = vmatpush.msra.mxu0 %v613
  %849 = vmatpush.msra.mxu0 %v612
  %850 = vmatpush.msra.mxu0 %v611
  %851 = vmatpush.msra.mxu0 %v610
  %852 = vmatpush.msra.mxu0 %v609
  %853 = vmatmul.f32.gmra.mxu0 %v835
  %v854 = vpop.f32.mrf.mxu0
  %v855 = vadd.f32 %v622, %v854
  %856 = vdwg.mxu0
  %v857 = vxor.u32 %v855, 2147483648
  %v858 = vmul.f32 %v857, 1.442695
  %v859 = vpow.pop %v858
  %v860 = vadd.f32 %v859, 1.0
  %v861 = vrcp.pop %v860
  %v862 = vmul.f32 %v860, %v861
  %v863 = vsub.f32 1.0, %v862
  %v864 = vmul.f32 %v861, %v863
  %v865 = vadd.f32 %v861, %v864
  %vm866 = vweird.f32 %v860
  %vm867 = vweird.f32 %v861
  %vm868 = vmor %vm866, %vm867
  %v869 = vsel %vm868, %v861, %v865
  %v870 = vand.u32 2147483647, %v860
  %vm871 = vcmp.eq.f32.partialorder %v870, 8.507059e+37
  %v872 = vand.u32 %v860, 2147483648
  %v873 = vor.u32 1.1754944e-38, %v872
  %v874 = vsel %vm871, %v873, %v869
  %v875 = vmul.f32 1.0, %v874
  %v876 = vtanh.pop %v855
  %v877 = vmul.f32 %v875, %v817
  %879 = vrot.lane.b32.xlu0 %v876, 64
  %v880 = vpop.permute.xlu0 %879
  %v882 = vmul.f32 %v875, %v880
  %884 = vrot.lane.b32.xlu0 %v882, 32
  %v885 = vpop.permute.xlu0 %884
  %v887 = vadd.f32 %v877, %v885
  %v888 = vtanh.pop %v887
  %890 = vrot.lane.b32.xlu0 %v888, 64
  %v891 = vpop.permute.xlu0 %890
  %v893 = vmul.f32 %v875, %v891
  %895 = vrot.lane.b32.xlu0 %v893, 32
  %v896 = vpop.permute.xlu0 %895
  %898 = vst.msk [vmem:[%s312] sm:$0xff] %vm27, %v896
  %v899 = vld [vmem:[%s384] sm:$0xff]
  %900 = vrot.lane.b32.xlu0 %v893, 64
  %v901 = vpop.permute.xlu0 %900
  %v903 = vsel %vm27, %v899, %v901
  %v905 = vsel %vm32, %v903, 0
  %907 = vmatpush.msra.mxu0 0.0
  %908 = vmatpush.msra.mxu0 0.0
  %909 = vmatpush.msra.mxu0 0.0
  %910 = vmatpush.msra.mxu0 0.0
  %911 = vmatpush.msra.mxu0 0.0
  %912 = vmatpush.msra.mxu0 0.0
  %913 = vmatpush.msra.mxu0 0.0
  %914 = vmatpush.msra.mxu0 0.0
  %915 = vmatpush.msra.mxu0 %v616
  %916 = vmatpush.msra.mxu0 %v615
  %917 = vmatpush.msra.mxu0 %v614
  %918 = vmatpush.msra.mxu0 %v613
  %919 = vmatpush.msra.mxu0 %v612
  %920 = vmatpush.msra.mxu0 %v611
  %921 = vmatpush.msra.mxu0 %v610
  %922 = vmatpush.msra.mxu0 %v609
  %923 = vmatmul.f32.gmra.mxu0 %v905
  %v924 = vpop.f32.mrf.mxu0
  %v925 = vadd.f32 %v622, %v924
  %926 = vdwg.mxu0
  %v927 = vxor.u32 %v925, 2147483648
  %v928 = vmul.f32 %v927, 1.442695
  %v929 = vpow.pop %v928
  %v930 = vadd.f32 %v929, 1.0
  %v931 = vrcp.pop %v930
  %v932 = vmul.f32 %v930, %v931
  %v933 = vsub.f32 1.0, %v932
  %v934 = vmul.f32 %v931, %v933
  %v935 = vadd.f32 %v931, %v934
  %vm936 = vweird.f32 %v930
  %vm937 = vweird.f32 %v931
  %vm938 = vmor %vm936, %vm937
  %v939 = vsel %vm938, %v931, %v935
  %v940 = vand.u32 2147483647, %v930
  %vm941 = vcmp.eq.f32.partialorder %v940, 8.507059e+37
  %v942 = vand.u32 %v930, 2147483648
  %v943 = vor.u32 1.1754944e-38, %v942
  %v944 = vsel %vm941, %v943, %v939
  %v945 = vmul.f32 1.0, %v944
  %v946 = vtanh.pop %v925
  %v947 = vmul.f32 %v945, %v887
  %949 = vrot.lane.b32.xlu0 %v946, 64
  %v950 = vpop.permute.xlu0 %949
  %v952 = vmul.f32 %v945, %v950
  %954 = vrot.lane.b32.xlu0 %v952, 32
  %v955 = vpop.permute.xlu0 %954
  %v957 = vadd.f32 %v947, %v955
  %v958 = vtanh.pop %v957
  %960 = vrot.lane.b32.xlu0 %v958, 64
  %v961 = vpop.permute.xlu0 %960
  %v963 = vmul.f32 %v945, %v961
  %965 = vrot.lane.b32.xlu0 %v963, 32
  %v966 = vpop.permute.xlu0 %965
  %968 = vst.msk [vmem:[%s384] sm:$0xff] %vm27, %v966
  %v969 = vld [vmem:[%s456] sm:$0xff]
  %970 = vrot.lane.b32.xlu0 %v963, 64
  %v971 = vpop.permute.xlu0 %970
  %v973 = vsel %vm27, %v969, %v971
  %v975 = vsel %vm32, %v973, 0
  %977 = vmatpush.msra.mxu0 0.0
  %978 = vmatpush.msra.mxu0 0.0
  %979 = vmatpush.msra.mxu0 0.0
  %980 = vmatpush.msra.mxu0 0.0
  %981 = vmatpush.msra.mxu0 0.0
  %982 = vmatpush.msra.mxu0 0.0
  %983 = vmatpush.msra.mxu0 0.0
  %984 = vmatpush.msra.mxu0 0.0
  %985 = vmatpush.msra.mxu0 %v616
  %986 = vmatpush.msra.mxu0 %v615
  %987 = vmatpush.msra.mxu0 %v614
  %988 = vmatpush.msra.mxu0 %v613
  %989 = vmatpush.msra.mxu0 %v612
  %990 = vmatpush.msra.mxu0 %v611
  %991 = vmatpush.msra.mxu0 %v610
  %992 = vmatpush.msra.mxu0 %v609
  %993 = vmatmul.f32.gmra.mxu0 %v975
  %v994 = vpop.f32.mrf.mxu0
  %v995 = vadd.f32 %v622, %v994
  %996 = vdwg.mxu0
  %v997 = vxor.u32 %v995, 2147483648
  %v998 = vmul.f32 %v997, 1.442695
  %v999 = vpow.pop %v998
  %v1000 = vadd.f32 %v999, 1.0
  %v1001 = vrcp.pop %v1000
  %v1002 = vmul.f32 %v1000, %v1001
  %v1003 = vsub.f32 1.0, %v1002
  %v1004 = vmul.f32 %v1001, %v1003
  %v1005 = vadd.f32 %v1001, %v1004
  %vm1006 = vweird.f32 %v1000
  %vm1007 = vweird.f32 %v1001
  %vm1008 = vmor %vm1006, %vm1007
  %v1009 = vsel %vm1008, %v1001, %v1005
  %v1010 = vand.u32 2147483647, %v1000
  %vm1011 = vcmp.eq.f32.partialorder %v1010, 8.507059e+37
  %v1012 = vand.u32 %v1000, 2147483648
  %v1013 = vor.u32 1.1754944e-38, %v1012
  %v1014 = vsel %vm1011, %v1013, %v1009
  %v1015 = vmul.f32 1.0, %v1014
  %v1016 = vtanh.pop %v995
  %v1017 = vmul.f32 %v1015, %v957
  %1019 = vrot.lane.b32.xlu0 %v1016, 64
  %v1020 = vpop.permute.xlu0 %1019
  %v1022 = vmul.f32 %v1015, %v1020
  %1024 = vrot.lane.b32.xlu0 %v1022, 32
  %v1025 = vpop.permute.xlu0 %1024
  %v1027 = vadd.f32 %v1017, %v1025
  %v1028 = vtanh.pop %v1027
  %1030 = vrot.lane.b32.xlu0 %v1028, 64
  %v1031 = vpop.permute.xlu0 %1030
  %v1033 = vmul.f32 %v1015, %v1031
  %1035 = vrot.lane.b32.xlu0 %v1033, 32
  %v1036 = vpop.permute.xlu0 %1035
  %1038 = vst.msk [vmem:[%s456] sm:$0xff] %vm27, %v1036
  %v1039 = vld [vmem:[%s528] sm:$0xff]
  %1040 = vrot.lane.b32.xlu0 %v1033, 64
  %v1041 = vpop.permute.xlu0 %1040
  %v1043 = vsel %vm27, %v1039, %v1041
  %v1045 = vsel %vm32, %v1043, 0
  %1047 = vmatpush.msra.mxu0 0.0
  %1048 = vmatpush.msra.mxu0 0.0
  %1049 = vmatpush.msra.mxu0 0.0
  %1050 = vmatpush.msra.mxu0 0.0
  %1051 = vmatpush.msra.mxu0 0.0
  %1052 = vmatpush.msra.mxu0 0.0
  %1053 = vmatpush.msra.mxu0 0.0
  %1054 = vmatpush.msra.mxu0 0.0
  %1055 = vmatpush.msra.mxu0 %v616
  %1056 = vmatpush.msra.mxu0 %v615
  %1057 = vmatpush.msra.mxu0 %v614
  %1058 = vmatpush.msra.mxu0 %v613
  %1059 = vmatpush.msra.mxu0 %v612
  %1060 = vmatpush.msra.mxu0 %v611
  %1061 = vmatpush.msra.mxu0 %v610
  %1062 = vmatpush.msra.mxu0 %v609
  %1063 = vmatmul.f32.gmra.mxu0 %v1045
  %v1064 = vpop.f32.mrf.mxu0
  %v1065 = vadd.f32 %v622, %v1064
  %1066 = vdwg.mxu0
  %v1067 = vxor.u32 %v1065, 2147483648
  %v1068 = vmul.f32 %v1067, 1.442695
  %v1069 = vpow.pop %v1068
  %v1070 = vadd.f32 %v1069, 1.0
  %v1071 = vrcp.pop %v1070
  %v1072 = vmul.f32 %v1070, %v1071
  %v1073 = vsub.f32 1.0, %v1072
  %v1074 = vmul.f32 %v1071, %v1073
  %v1075 = vadd.f32 %v1071, %v1074
  %vm1076 = vweird.f32 %v1070
  %vm1077 = vweird.f32 %v1071
  %vm1078 = vmor %vm1076, %vm1077
  %v1079 = vsel %vm1078, %v1071, %v1075
  %v1080 = vand.u32 2147483647, %v1070
  %vm1081 = vcmp.eq.f32.partialorder %v1080, 8.507059e+37
  %v1082 = vand.u32 %v1070, 2147483648
  %v1083 = vor.u32 1.1754944e-38, %v1082
  %v1084 = vsel %vm1081, %v1083, %v1079
  %v1085 = vmul.f32 1.0, %v1084
  %v1086 = vtanh.pop %v1065
  %v1087 = vmul.f32 %v1085, %v1027
  %1089 = vrot.lane.b32.xlu0 %v1086, 64
  %v1090 = vpop.permute.xlu0 %1089
  %v1092 = vmul.f32 %v1085, %v1090
  %1094 = vrot.lane.b32.xlu0 %v1092, 32
  %v1095 = vpop.permute.xlu0 %1094
  %v1097 = vadd.f32 %v1087, %v1095
  %v1098 = vtanh.pop %v1097
  %1100 = vrot.lane.b32.xlu0 %v1098, 64
  %v1101 = vpop.permute.xlu0 %1100
  %v1103 = vmul.f32 %v1085, %v1101
  %1105 = vrot.lane.b32.xlu0 %v1103, 32
  %v1106 = vpop.permute.xlu0 %1105
  %1108 = vst.msk [vmem:[%s528] sm:$0xff] %vm27, %v1106
  %v1109 = vld [vmem:[%s600] sm:$0xff]
  %1110 = vrot.lane.b32.xlu0 %v1103, 64
  %v1111 = vpop.permute.xlu0 %1110
  %v1113 = vsel %vm27, %v1109, %v1111
  %v1115 = vsel %vm32, %v1113, 0
  %1117 = vmatpush.msra.mxu0 0.0
  %1118 = vmatpush.msra.mxu0 0.0
  %1119 = vmatpush.msra.mxu0 0.0
  %1120 = vmatpush.msra.mxu0 0.0
  %1121 = vmatpush.msra.mxu0 0.0
  %1122 = vmatpush.msra.mxu0 0.0
  %1123 = vmatpush.msra.mxu0 0.0
  %1124 = vmatpush.msra.mxu0 0.0
  %1125 = vmatpush.msra.mxu0 %v616
  %1126 = vmatpush.msra.mxu0 %v615
  %1127 = vmatpush.msra.mxu0 %v614
  %1128 = vmatpush.msra.mxu0 %v613
  %1129 = vmatpush.msra.mxu0 %v612
  %1130 = vmatpush.msra.mxu0 %v611
  %1131 = vmatpush.msra.mxu0 %v610
  %1132 = vmatpush.msra.mxu0 %v609
  %1133 = vmatmul.f32.gmra.mxu0 %v1115
  %v1134 = vpop.f32.mrf.mxu0
  %v1135 = vadd.f32 %v622, %v1134
  %1136 = vdwg.mxu0
  %v1137 = vxor.u32 %v1135, 2147483648
  %v1138 = vmul.f32 %v1137, 1.442695
  %v1139 = vpow.pop %v1138
  %v1140 = vadd.f32 %v1139, 1.0
  %v1141 = vrcp.pop %v1140
  %v1142 = vmul.f32 %v1140, %v1141
  %v1143 = vsub.f32 1.0, %v1142
  %v1144 = vmul.f32 %v1141, %v1143
  %v1145 = vadd.f32 %v1141, %v1144
  %vm1146 = vweird.f32 %v1140
  %vm1147 = vweird.f32 %v1141
  %vm1148 = vmor %vm1146, %vm1147
  %v1149 = vsel %vm1148, %v1141, %v1145
  %v1150 = vand.u32 2147483647, %v1140
  %vm1151 = vcmp.eq.f32.partialorder %v1150, 8.507059e+37
  %v1152 = vand.u32 %v1140, 2147483648
  %v1153 = vor.u32 1.1754944e-38, %v1152
  %v1154 = vsel %vm1151, %v1153, %v1149
  %v1155 = vmul.f32 1.0, %v1154
  %v1156 = vtanh.pop %v1135
  %v1157 = vmul.f32 %v1155, %v1097
  %1159 = vrot.lane.b32.xlu0 %v1156, 64
  %v1160 = vpop.permute.xlu0 %1159
  %v1162 = vmul.f32 %v1155, %v1160
  %1164 = vrot.lane.b32.xlu0 %v1162, 32
  %v1165 = vpop.permute.xlu0 %1164
  %v1167 = vadd.f32 %v1157, %v1165
  %v1168 = vtanh.pop %v1167
  %1170 = vrot.lane.b32.xlu0 %v1168, 64
  %v1171 = vpop.permute.xlu0 %1170
  %v1173 = vmul.f32 %v1155, %v1171
  %1175 = vrot.lane.b32.xlu0 %v1173, 32
  %v1176 = vpop.permute.xlu0 %1175
  %1178 = vst.msk [vmem:[%s600] sm:$0xff] %vm27, %v1176
  %s1179 = scalar_lea.vmem %s4, 8
  %1180 = vst.msk [vmem:[%s1179] sm:$0xff] %vm27, %v1176
  %1182 = vrot.lane.b32.xlu0 %v1167, 96
  %v1183 = vpop.permute.xlu0 %1182
  %s1185 = scalar_lea.vmem %s5, 8
  %1186 = vst.msk [vmem:[%s1185] sm:$0xff] %vm27, %v1183
  %v1187 = vld [vmem:[#allocation2] sm:$0xff]
  %v1188 = vld [vmem:[#allocation2 + $0x8] sm:$0xff]
  %v1189 = vld [vmem:[#allocation2 + $0x10] sm:$0xff]
  %v1190 = vld [vmem:[#allocation2 + $0x18] sm:$0xff]
  %v1191 = vld [vmem:[#allocation2 + $0x20] sm:$0xff]
  %v1192 = vld [vmem:[#allocation2 + $0x28] sm:$0xff]
  %v1193 = vld [vmem:[#allocation2 + $0x30] sm:$0xff]
  %v1194 = vld [vmem:[#allocation2 + $0x38] sm:$0xff]
  %1195 = vst.msk [vmem:[%s3] sm:$0xff] %vm27, %v1187
  %1196 = vst.msk [vmem:[%s3 + $0x8] sm:$0xff] %vm27, %v1188
  %1197 = vst.msk [vmem:[%s3 + $0x10] sm:$0xff] %vm27, %v1189
  %1198 = vst.msk [vmem:[%s3 + $0x18] sm:$0xff] %vm27, %v1190
  %1199 = vst.msk [vmem:[%s3 + $0x20] sm:$0xff] %vm27, %v1191
  %1200 = vst.msk [vmem:[%s3 + $0x28] sm:$0xff] %vm27, %v1192
  %1201 = vst.msk [vmem:[%s3 + $0x30] sm:$0xff] %vm27, %v1193
  %1202 = vst.msk [vmem:[%s3 + $0x38] sm:$0xff] %vm27, %v1194
  // Predicated region
  $region14: #{encoder_forward.1} parent=0 // pred_check
    _
  $region15: #{encoder_forward.1} parent=0 // pred_check_branch
    %1204 = sbr.rel (0) target = $region17
  $region16: #{encoder_forward.1} parent=0 // pred_region
    _
  $region17: #{encoder_forward.1} parent=0 // pred_fallthru
    _
  // Predicated region
  $region18: #{encoder_forward.1} parent=0 // pred_check
    _
  $region19: #{encoder_forward.1} parent=0 // pred_check_branch
    %1206 = sbr.rel (0) target = $region21
  $region20: #{encoder_forward.1} parent=0 // pred_region
    _
  $region21: #{encoder_forward.1} parent=0 // pred_fallthru
    _
  // Predicated region
  $region22: #{encoder_forward.1} parent=0 // pred_check
    _
  $region23: #{encoder_forward.1} parent=0 // pred_check_branch
    %1208 = sbr.rel (0) target = $region25
  $region24: #{encoder_forward.1} parent=0 // pred_region
    _
  $region25: #{encoder_forward.1} parent=0 // pred_fallthru
    _
  // Predicated region
  $region26: #{encoder_forward.1} parent=0 // pred_check
    _
  $region27: #{encoder_forward.1} parent=0 // pred_check_branch
    %1210 = sbr.rel (0) target = $region29
  $region28: #{encoder_forward.1} parent=0 // pred_region
    _
  $region29: #{encoder_forward.1} parent=0 // pred_fallthru
    _
  // Predicated region
  $region30: #{encoder_forward.1} parent=0 // pred_check
    _
  $region31: #{encoder_forward.1} parent=0 // pred_check_branch
    %1212 = sbr.rel (0) target = $region33
  $region32: #{encoder_forward.1} parent=0 // pred_region
    _
  $region33: #{encoder_forward.1} parent=0 // pred_fallthru
    _
  // Predicated region
  $region34: #{encoder_forward.1} parent=0 // pred_check
    _
  $region35: #{encoder_forward.1} parent=0 // pred_check_branch
    %1214 = sbr.rel (0) target = $region37
  $region36: #{encoder_forward.1} parent=0 // pred_region
    _
  $region37: #{encoder_forward.1} parent=0 // pred_fallthru
    _

</llo_original>
